<compile_context>
chip_gen: v6e
topology: v6e:2x2x1
jax: 0.10.0
libtpu: 0.0.40
codegen_flags: <defaults>
</compile_context>

<pallas_src>
import functools

import jax
import jax.numpy as jnp
import numpy as np
from jax.experimental import pallas as pl
from jax.experimental.pallas import tpu as pltpu

EPS = 1e-5
LANE = 128


def _round_up(v, m):
    return (v + m - 1) // m * m


# ------------------------------ Pallas kernels ------------------------------

def _conv1_kernel(x_ref, w_ref, *rest, stride, Ho, Wo, has_ds):
    """Per-image conv1 (3x3, stride s) + optional fused 1x1 stride-s downsample.

    x_ref : (1, s, s, Hh, Wh, Cpi) bf16 -- space-to-depth (phase) layout of the
            spatially padded input; all window reads are contiguous static slices.
    w_ref : (9, Cpi, Cpo) bf16, slab k = kh*3 + kw.
    outputs: y (1, Ho, Wo, Cpo) bf16 (raw conv, pre-BN),
             stats (1, 8, Cpo) f32 (row0 = channel sum, row1 = channel sumsq,
             both from the f32 accumulator), plus (yd, statsd) when has_ds.
    """
    if has_ds:
        wd_ref, y_ref, st_ref, yd_ref, std_ref = rest
    else:
        y_ref, st_ref = rest

    x = x_ref[...][0]                      # (s, s, Hh, Wh, Cpi) bf16 value
    w = w_ref[...]                         # (9, Cpi, Cpo)
    cpi = x.shape[-1]
    cpo = w.shape[-1]

    def window(kh, kw):
        ph, oh = kh % stride, kh // stride
        pw, ow = kw % stride, kw // stride
        return x[ph, pw, oh:oh + Ho, ow:ow + Wo, :].reshape(Ho * Wo, cpi)

    def stats_of(a):
        return jnp.concatenate(
            [jnp.sum(a, axis=0, keepdims=True),
             jnp.sum(a * a, axis=0, keepdims=True),
             jnp.zeros((6, cpo), jnp.float32)], axis=0).reshape(1, 8, cpo)

    # conv3x3 = sum of 9 shifted-window matmuls; contiguous acc += chain, f32 acc.
    acc = jnp.zeros((Ho * Wo, cpo), jnp.float32)
    for kh in range(3):
        for kw in range(3):
            acc += jnp.dot(window(kh, kw), w[kh * 3 + kw],
                           preferred_element_type=jnp.float32)

    y_ref[...] = acc.reshape(1, Ho, Wo, cpo).astype(y_ref.dtype)   # bf16 store
    st_ref[...] = stats_of(acc)

    if has_ds:
        # 1x1 stride-s conv == the (kh=1, kw=1) window (original, unpadded origin).
        accd = jnp.dot(window(1, 1), wd_ref[...], preferred_element_type=jnp.float32)
        yd_ref[...] = accd.reshape(1, Ho, Wo, cpo).astype(yd_ref.dtype)
        std_ref[...] = stats_of(accd)


def _conv2_kernel(y1_ref, coef_ref, w_ref, y_ref, st_ref, *, Ho, Wo):
    """Per-image conv2 (3x3, stride 1) with fused BN1-apply + ReLU + zero halo.

    y1_ref   : (1, Ho, Wo, Cpo) bf16 raw conv1 output
    coef_ref : (8, Cpo) f32, row0 = scale1, row1 = shift1 (folded BN1)
    w_ref    : (9, Cpo, Cpo) bf16
    """
    cpo = y1_ref.shape[-1]
    c = coef_ref[...]
    scale1 = c[0:1, :].reshape(1, 1, cpo)
    shift1 = c[1:2, :].reshape(1, 1, cpo)

    t = y1_ref[...][0].astype(jnp.float32)                      # (Ho, Wo, Cpo)
    t = jnp.maximum(t * scale1 + shift1, 0.0).astype(jnp.bfloat16)

    # zero 1-px halo, built in VMEM (no XLA pad pass between conv1 and conv2)
    zr = jnp.zeros((1, Wo, cpo), t.dtype)
    t = jnp.concatenate([zr, t, zr], axis=0)                    # (Ho+2, Wo, Cpo)
    zc = jnp.zeros((Ho + 2, 1, cpo), t.dtype)
    t = jnp.concatenate([zc, t, zc], axis=1)                    # (Ho+2, Wo+2, Cpo)

    w = w_ref[...]
    acc = jnp.zeros((Ho * Wo, cpo), jnp.float32)
    for kh in range(3):
        for kw in range(3):
            win = t[kh:kh + Ho, kw:kw + Wo, :].reshape(Ho * Wo, cpo)
            acc += jnp.dot(win, w[kh * 3 + kw], preferred_element_type=jnp.float32)

    y_ref[...] = acc.reshape(1, Ho, Wo, cpo).astype(y_ref.dtype)
    st_ref[...] = jnp.concatenate(
        [jnp.sum(acc, axis=0, keepdims=True),
         jnp.sum(acc * acc, axis=0, keepdims=True),
         jnp.zeros((6, cpo), jnp.float32)], axis=0).reshape(1, 8, cpo)


def _add_relu_kernel(y2_ref, id_ref, coef_ref, o_ref):
    """out = relu(y2*scale2 + shift2 + id*scale_id + shift_id), (tile_m, Cp) tiles.

    coef_ref: (8, Cp) f32, rows 0..3 = scale2, shift2, scale_id, shift_id.
    """
    c = coef_ref[...]
    y2 = y2_ref[...].astype(jnp.float32)
    idv = id_ref[...].astype(jnp.float32)
    out = y2 * c[0:1, :] + c[1:2, :] + idv * c[2:3, :] + c[3:4, :]
    o_ref[...] = jnp.maximum(out, 0.0)


# ------------------------------ pallas_call wrappers ------------------------------

def _conv1_call(xps, w9, wd, stride, Ho, Wo):
    N, s, _, Hh, Wh, Cpi = xps.shape
    Cpo = w9.shape[-1]
    has_ds = wd is not None

    kern = functools.partial(_conv1_kernel, stride=stride, Ho=Ho, Wo=Wo, has_ds=has_ds)

    in_specs = [
        pl.BlockSpec((1, s, s, Hh, Wh, Cpi), lambda n: (n, 0, 0, 0, 0, 0)),
        pl.BlockSpec((9, Cpi, Cpo), lambda n: (0, 0, 0)),
    ]
    args = [xps, w9]
    out_shape = [
        jax.ShapeDtypeStruct((N, Ho, Wo, Cpo), jnp.bfloat16),
        jax.ShapeDtypeStruct((N, 8, Cpo), jnp.float32),
    ]
    out_specs = [
        pl.BlockSpec((1, Ho, Wo, Cpo), lambda n: (n, 0, 0, 0)),
        pl.BlockSpec((1, 8, Cpo), lambda n: (n, 0, 0)),
    ]
    flops = 2 * N * Ho * Wo * 9 * Cpi * Cpo
    bytes_acc = (xps.size * 2 + w9.size * 2
                 + N * Ho * Wo * Cpo * 2 + N * 8 * Cpo * 4)
    if has_ds:
        in_specs.append(pl.BlockSpec((Cpi, Cpo), lambda n: (0, 0)))
        args.append(wd)
        out_shape += [
            jax.ShapeDtypeStruct((N, Ho, Wo, Cpo), jnp.bfloat16),
            jax.ShapeDtypeStruct((N, 8, Cpo), jnp.float32),
        ]
        out_specs += [
            pl.BlockSpec((1, Ho, Wo, Cpo), lambda n: (n, 0, 0, 0)),
            pl.BlockSpec((1, 8, Cpo), lambda n: (n, 0, 0)),
        ]
        flops += 2 * N * Ho * Wo * Cpi * Cpo
        bytes_acc += wd.size * 2 + N * Ho * Wo * Cpo * 2 + N * 8 * Cpo * 4

    return pl.pallas_call(
        kern,
        out_shape=tuple(out_shape),
        grid=(N,),
        in_specs=in_specs,
        out_specs=tuple(out_specs),
        compiler_params=pltpu.CompilerParams(dimension_semantics=("parallel",)),
        cost_estimate=pl.CostEstimate(flops=flops, transcendentals=0,
                                      bytes_accessed=bytes_acc),
    )(*args)


def _conv2_call(y1, coef1, w9, Ho, Wo):
    N = y1.shape[0]
    Cpo = w9.shape[-1]
    kern = functools.partial(_conv2_kernel, Ho=Ho, Wo=Wo)
    flops = 2 * N * Ho * Wo * 9 * Cpo * Cpo
    bytes_acc = (y1.size * 2 + coef1.size * 4 + w9.size * 2
                 + N * Ho * Wo * Cpo * 2 + N * 8 * Cpo * 4)
    return pl.pallas_call(
        kern,
        out_shape=(jax.ShapeDtypeStruct((N, Ho, Wo, Cpo), jnp.bfloat16),
                   jax.ShapeDtypeStruct((N, 8, Cpo), jnp.float32)),
        grid=(N,),
        in_specs=[
            pl.BlockSpec((1, Ho, Wo, Cpo), lambda n: (n, 0, 0, 0)),
            pl.BlockSpec((8, Cpo), lambda n: (0, 0)),
            pl.BlockSpec((9, Cpo, Cpo), lambda n: (0, 0, 0)),
        ],
        out_specs=(pl.BlockSpec((1, Ho, Wo, Cpo), lambda n: (n, 0, 0, 0)),
                   pl.BlockSpec((1, 8, Cpo), lambda n: (n, 0, 0))),
        compiler_params=pltpu.CompilerParams(dimension_semantics=("parallel",)),
        cost_estimate=pl.CostEstimate(flops=flops, transcendentals=0,
                                      bytes_accessed=bytes_acc),
    )(y1, coef1, w9)


def _add_relu(y2_flat, id_flat, coef, tile_m):
    Mp, Cp = y2_flat.shape
    bytes_acc = (y2_flat.size * y2_flat.dtype.itemsize
                 + id_flat.size * id_flat.dtype.itemsize
                 + coef.size * 4 + Mp * Cp * 4)
    return pl.pallas_call(
        _add_relu_kernel,
        out_shape=jax.ShapeDtypeStruct((Mp, Cp), jnp.float32),
        grid=(Mp // tile_m,),
        in_specs=[
            pl.BlockSpec((tile_m, Cp), lambda m: (m, 0)),
            pl.BlockSpec((tile_m, Cp), lambda m: (m, 0)),
            pl.BlockSpec((8, Cp), lambda m: (0, 0)),
        ],
        out_specs=pl.BlockSpec((tile_m, Cp), lambda m: (m, 0)),
        compiler_params=pltpu.CompilerParams(dimension_semantics=("parallel",)),
        cost_estimate=pl.CostEstimate(flops=5 * Mp * Cp, transcendentals=0,
                                      bytes_accessed=bytes_acc),
    )(y2_flat, id_flat, coef)


# ------------------------------ glue (plain JAX, no data blow-up) ------------------------------

def _w3x3_to_9(w, cpi, cpo):
    """(Cout, Cin, 3, 3) -> (9, Cpi, Cpo), zero-padded, bf16; slab k = kh*3 + kw."""
    cout, cin, _, _ = w.shape
    w9 = jnp.transpose(w, (2, 3, 1, 0)).reshape(9, cin, cout)
    w9 = jnp.pad(w9, ((0, 0), (0, cpi - cin), (0, cpo - cout)))
    return w9.astype(jnp.bfloat16)


def _w1x1_to_2d(w, cpi, cpo):
    cout, cin, _, _ = w.shape
    wm = jnp.transpose(w[:, :, 0, 0], (1, 0))               # (Cin, Cout)
    wm = jnp.pad(wm, ((0, cpi - cin), (0, cpo - cout)))
    return wm.astype(jnp.bfloat16)


def _padc(v, cp):
    return jnp.pad(v.astype(jnp.float32), (0, cp - v.shape[0]))


def _bn_scale_shift(stats, count, gamma_p, beta_p):
    """Fold training-mode BN into per-channel scale/shift from per-image partials."""
    s = jnp.sum(stats[:, 0, :], axis=0)
    q = jnp.sum(stats[:, 1, :], axis=0)
    mean = s / count
    var = jnp.maximum(q / count - mean * mean, 0.0)          # biased var, clamped
    scale = gamma_p * jax.lax.rsqrt(var + EPS)
    shift = beta_p - mean * scale
    return scale, shift


def _to_phases(xp, stride, Hh, Wh):
    """Space-to-depth: (N, Hp, Wp, C) -> (N, s, s, Hh, Wh, C) so every in-kernel
    window read is a contiguous (non-strided) slice."""
    rows = []
    for ph in range(stride):
        cols = []
        for pw in range(stride):
            p = xp[:, ph::stride, pw::stride, :]
            p = jnp.pad(p, ((0, 0), (0, Hh - p.shape[1]), (0, Wh - p.shape[2]), (0, 0)))
            cols.append(p)
        rows.append(jnp.stack(cols, axis=1))
    return jnp.stack(rows, axis=1)


def residual_block_forward(x_nchw, params, stride):
    x = jnp.transpose(x_nchw, (0, 2, 3, 1)).astype(jnp.float32)   # NHWC
    N, H, W, Cin = x.shape
    Cout = params["w1"].shape[0]
    Cpi = _round_up(Cin, LANE)
    Cpo = _round_up(Cout, LANE)
    Ho = (H - 1) // stride + 1
    Wo = (W - 1) // stride + 1
    M = N * Ho * Wo
    has_ds = (stride != 1) or (Cin != Cout)

    # input prep (one pass): lane-dense channel pad + spatial pad + phase layout, bf16
    xcp = jnp.pad(x, ((0, 0), (0, 0), (0, 0), (0, Cpi - Cin)))
    xp = jnp.pad(xcp, ((0, 0), (1, 1), (1, 1), (0, 0)))
    Hh = (H + 2 + stride - 1) // stride
    Wh = (W + 2 + stride - 1) // stride
    xps = _to_phases(xp, stride, Hh, Wh).astype(jnp.bfloat16)

    w1 = _w3x3_to_9(params["w1"], Cpi, Cpo)
    w2 = _w3x3_to_9(params["w2"], Cpo, Cpo)
    wd = _w1x1_to_2d(params["wd"], Cpi, Cpo) if has_ds else None
    # NOTE: conv biases (b1/b2/bd) intentionally dropped: a per-channel constant added
    # before training-mode BN is exactly cancelled by the mean subtraction.

    # ---- stage 1: conv1 (+ fused 1x1 downsample), bf16 outputs + f32 channel stats ----
    outs = _conv1_call(xps, w1, wd, stride, Ho, Wo)
    if has_ds:
        y1, st1, yd, std = outs
    else:
        y1, st1 = outs

    scale1, shift1 = _bn_scale_shift(st1, M, _padc(params["g1"], Cpo),
                                     _padc(params["be1"], Cpo))
    coef1 = jnp.concatenate([scale1[None], shift1[None],
                             jnp.zeros((6, Cpo), jnp.float32)], axis=0)    # (8, Cpo)

    # ---- stage 2: conv2 with fused BN1-apply + ReLU + zero halo in-kernel ----
    y2, st2 = _conv2_call(y1, coef1, w2, Ho, Wo)
    scale2, shift2 = _bn_scale_shift(st2, M, _padc(params["g2"], Cpo),
                                     _padc(params["be2"], Cpo))

    # ---- identity path (folded BN of the 1x1 conv, or raw passthrough) ----
    if has_ds:
        scaled, shiftd = _bn_scale_shift(std, M, _padc(params["gd"], Cpo),
                                         _padc(params["bed"], Cpo))
        id_flat = yd.reshape(M, Cpo)                      # bf16
    else:
        scaled = jnp.ones((Cpo,), jnp.float32)
        shiftd = jnp.zeros((Cpo,), jnp.float32)
        id_flat = xcp.reshape(M, Cpo)                     # exact f32 passthrough

    coef = jnp.concatenate([scale2[None], shift2[None], scaled[None], shiftd[None],
                            jnp.zeros((4, Cpo), jnp.float32)], axis=0)     # (8, Cpo)

    # ---- stage 3: fused BN2-apply + residual add + ReLU, lane-dense row tiles ----
    m8 = _round_up(M, 8)
    tile_m = min(1024, m8)
    mpad = _round_up(m8, tile_m)
    y2_flat = y2.reshape(M, Cpo)
    if mpad > M:
        y2_flat = jnp.pad(y2_flat, ((0, mpad - M), (0, 0)))
        id_flat = jnp.pad(id_flat, ((0, mpad - M), (0, 0)))
    out_flat = _add_relu(y2_flat, id_flat, coef, tile_m)

    out = out_flat[:M, :Cout].reshape(N, Ho, Wo, Cout)
    return jnp.transpose(out, (0, 3, 1, 2))                    # NCHW


# ------------------------------ pure-JAX reference ------------------------------

def _conv_ref(x, w, b, stride, pad):
    y = jax.lax.conv_general_dilated(
        x, w, (stride, stride), [(pad, pad), (pad, pad)],
        dimension_numbers=("NCHW", "OIHW", "NCHW"))
    return y + b[None, :, None, None]


def _bn_ref(y, gamma, beta):
    mean = jnp.mean(y, axis=(0, 2, 3), keepdims=True)
    var = jnp.mean((y - mean) ** 2, axis=(0, 2, 3), keepdims=True)
    return (y - mean) / jnp.sqrt(var + EPS) * gamma[None, :, None, None] \
        + beta[None, :, None, None]


def residual_block_ref(x, params, stride):
    cin = x.shape[1]
    cout = params["w1"].shape[0]
    out = _conv_ref(x, params["w1"], params["b1"], stride, 1)
    out = jnp.maximum(_bn_ref(out, params["g1"], params["be1"]), 0.0)
    out = _conv_ref(out, params["w2"], params["b2"], 1, 1)
    out = _bn_ref(out, params["g2"], params["be2"])
    if stride != 1 or cin != cout:
        identity = _conv_ref(x, params["wd"], params["bd"], stride, 0)
        identity = _bn_ref(identity, params["gd"], params["bed"])
    else:
        identity = x
    return jnp.maximum(out + identity, 0.0)


# ------------------------------ main ------------------------------

def _make_params(key, cin, cout, with_ds):
    ks = jax.random.split(key, 12)
    p = {
        "w1": jax.random.normal(ks[0], (cout, cin, 3, 3), jnp.float32) * 0.1,
        "b1": jax.random.normal(ks[1], (cout,), jnp.float32) * 0.1,
        "g1": 1.0 + 0.1 * jax.random.normal(ks[2], (cout,), jnp.float32),
        "be1": 0.1 * jax.random.normal(ks[3], (cout,), jnp.float32),
        "w2": jax.random.normal(ks[4], (cout, cout, 3, 3), jnp.float32) * 0.1,
        "b2": jax.random.normal(ks[5], (cout,), jnp.float32) * 0.1,
        "g2": 1.0 + 0.1 * jax.random.normal(ks[6], (cout,), jnp.float32),
        "be2": 0.1 * jax.random.normal(ks[7], (cout,), jnp.float32),
    }
    if with_ds:
        p.update({
            "wd": jax.random.normal(ks[8], (cout, cin, 1, 1), jnp.float32) * 0.1,
            "bd": jax.random.normal(ks[9], (cout,), jnp.float32) * 0.1,
            "gd": 1.0 + 0.1 * jax.random.normal(ks[10], (cout,), jnp.float32),
            "bed": 0.1 * jax.random.normal(ks[11], (cout,), jnp.float32),
        })
    return p


if __name__ == "__main__":
    # tolerance accounts for bf16 MXU operands / bf16 intermediates (f32 accumulation)
    RTOL = ATOL = 2e-2
    root = jax.random.PRNGKey(0)
    kp1, kx1, kp2, kx2 = jax.random.split(root, 4)

    # case 1: stride=2, Cin != Cout -> downsample (1x1 conv + BN) path exercised
    N, Cin, Cout, H, W, stride = 2, 4, 8, 16, 16, 2
    params = _make_params(kp1, Cin, Cout, with_ds=True)
    x = jax.random.normal(kx1, (N, Cin, H, W), jnp.float32)
    out = jax.block_until_ready(residual_block_forward(x, params, stride))
    ref = jax.block_until_ready(residual_block_ref(x, params, stride))
    np.testing.assert_allclose(np.asarray(out), np.asarray(ref), rtol=RTOL, atol=ATOL)
    assert out.shape == (N, Cout, H // stride, W // stride)

    # case 2: stride=1, Cin == Cout -> raw identity passthrough (nn.Sequential())
    params1 = _make_params(kp2, 8, 8, with_ds=False)
    x1 = jax.random.normal(kx2, (2, 8, 16, 16), jnp.float32)
    out1 = jax.block_until_ready(residual_block_forward(x1, params1, 1))
    ref1 = jax.block_until_ready(residual_block_ref(x1, params1, 1))
    np.testing.assert_allclose(np.asarray(out1), np.asarray(ref1), rtol=RTOL, atol=ATOL)
    assert out1.shape == (2, 8, 16, 16)

    print("KERNEL_OK")
</pallas_src>

<mosaic_0001>
module attributes {stable_mosaic.version = 11 : i64} {
  func.func @_conv1_kernel(%arg0: i32, %arg1: memref<1x2x2x9x9x128xbf16, #tpu.memory_space<vmem>>, %arg2: memref<9x128x128xbf16, #tpu.memory_space<vmem>>, %arg3: memref<128x128xbf16, #tpu.memory_space<vmem>>, %arg4: memref<1x8x8x128xbf16, #tpu.memory_space<vmem>>, %arg5: memref<1x8x128xf32, #tpu.memory_space<vmem>>, %arg6: memref<1x8x8x128xbf16, #tpu.memory_space<vmem>>, %arg7: memref<1x8x128xf32, #tpu.memory_space<vmem>>) attributes {dimension_semantics = [#tpu.dimension_semantics<parallel>], iteration_bounds = array<i64: 2>, scalar_prefetch = 0 : i64, scratch_operands = 0 : i64, tpu.core_type = #tpu.core_type<tc>, window_params = [{transform_indices = @transform_0, window_bounds = array<i64: 1, 2, 2, 9, 9, 128>}, {pipeline_mode = #tpu.pipeline_mode<synchronous>, transform_indices = @transform_1, window_bounds = array<i64: 9, 128, 128>}, {pipeline_mode = #tpu.pipeline_mode<synchronous>, transform_indices = @transform_2, window_bounds = array<i64: 128, 128>}, {transform_indices = @transform_3, window_bounds = array<i64: 1, 8, 8, 128>}, {transform_indices = @transform_4, window_bounds = array<i64: 1, 8, 128>}, {transform_indices = @transform_5, window_bounds = array<i64: 1, 8, 8, 128>}, {transform_indices = @transform_6, window_bounds = array<i64: 1, 8, 128>}]} {
    %c0 = arith.constant 0 : index
    %c0_0 = arith.constant 0 : index
    %c0_1 = arith.constant 0 : index
    %c0_2 = arith.constant 0 : index
    %c0_3 = arith.constant 0 : index
    %c0_4 = arith.constant 0 : index
    %0 = vector.load %arg1[%c0, %c0_0, %c0_1, %c0_2, %c0_3, %c0_4] : memref<1x2x2x9x9x128xbf16, #tpu.memory_space<vmem>>, vector<1x2x2x9x9x128xbf16>
    %1 = vector.shape_cast %0 : vector<1x2x2x9x9x128xbf16> to vector<2x2x9x9x128xbf16>
    %c0_5 = arith.constant 0 : index
    %c0_6 = arith.constant 0 : index
    %c0_7 = arith.constant 0 : index
    %2 = vector.load %arg2[%c0_5, %c0_6, %c0_7] : memref<9x128x128xbf16, #tpu.memory_space<vmem>>, vector<9x128x128xbf16>
    %cst = arith.constant 0.000000e+00 : f32
    %3 = vector.broadcast %cst : f32 to vector<64x128xf32>
    %4 = vector.extract_strided_slice %1 {offsets = [0, 0, 0, 0, 0], sizes = [1, 1, 8, 8, 128], strides = [1, 1, 1, 1, 1]} : vector<2x2x9x9x128xbf16> to vector<1x1x8x8x128xbf16>
    %5 = vector.shape_cast %4 : vector<1x1x8x8x128xbf16> to vector<8x8x128xbf16>
    %6 = vector.shape_cast %5 : vector<8x8x128xbf16> to vector<64x128xbf16>
    %7 = vector.extract_strided_slice %2 {offsets = [0, 0, 0], sizes = [1, 128, 128], strides = [1, 1, 1]} : vector<9x128x128xbf16> to vector<1x128x128xbf16>
    %8 = vector.shape_cast %7 : vector<1x128x128xbf16> to vector<128x128xbf16>
    %cst_8 = arith.constant dense<0.000000e+00> : vector<64x128xf32>
    %9 = tpu.matmul %6, %8, %cst_8 {dimension_numbers = #tpu.dot_dimension_numbers<[1], [0], [0], [1], [0, 0, 1, 1], [], []>} : vector<64x128xbf16>, vector<128x128xbf16>, vector<64x128xf32> -> vector<64x128xf32>
    %10 = arith.addf %3, %9 : vector<64x128xf32>
    %11 = vector.extract_strided_slice %1 {offsets = [0, 1, 0, 0, 0], sizes = [1, 1, 8, 8, 128], strides = [1, 1, 1, 1, 1]} : vector<2x2x9x9x128xbf16> to vector<1x1x8x8x128xbf16>
    %12 = vector.shape_cast %11 : vector<1x1x8x8x128xbf16> to vector<8x8x128xbf16>
    %13 = vector.shape_cast %12 : vector<8x8x128xbf16> to vector<64x128xbf16>
    %14 = vector.extract_strided_slice %2 {offsets = [1, 0, 0], sizes = [1, 128, 128], strides = [1, 1, 1]} : vector<9x128x128xbf16> to vector<1x128x128xbf16>
    %15 = vector.shape_cast %14 : vector<1x128x128xbf16> to vector<128x128xbf16>
    %cst_9 = arith.constant dense<0.000000e+00> : vector<64x128xf32>
    %16 = tpu.matmul %13, %15, %cst_9 {dimension_numbers = #tpu.dot_dimension_numbers<[1], [0], [0], [1], [0, 0, 1, 1], [], []>} : vector<64x128xbf16>, vector<128x128xbf16>, vector<64x128xf32> -> vector<64x128xf32>
    %17 = arith.addf %10, %16 : vector<64x128xf32>
    %18 = vector.extract_strided_slice %1 {offsets = [0, 0, 0, 1, 0], sizes = [1, 1, 8, 8, 128], strides = [1, 1, 1, 1, 1]} : vector<2x2x9x9x128xbf16> to vector<1x1x8x8x128xbf16>
    %19 = vector.shape_cast %18 : vector<1x1x8x8x128xbf16> to vector<8x8x128xbf16>
    %20 = vector.shape_cast %19 : vector<8x8x128xbf16> to vector<64x128xbf16>
    %21 = vector.extract_strided_slice %2 {offsets = [2, 0, 0], sizes = [1, 128, 128], strides = [1, 1, 1]} : vector<9x128x128xbf16> to vector<1x128x128xbf16>
    %22 = vector.shape_cast %21 : vector<1x128x128xbf16> to vector<128x128xbf16>
    %cst_10 = arith.constant dense<0.000000e+00> : vector<64x128xf32>
    %23 = tpu.matmul %20, %22, %cst_10 {dimension_numbers = #tpu.dot_dimension_numbers<[1], [0], [0], [1], [0, 0, 1, 1], [], []>} : vector<64x128xbf16>, vector<128x128xbf16>, vector<64x128xf32> -> vector<64x128xf32>
    %24 = arith.addf %17, %23 : vector<64x128xf32>
    %25 = vector.extract_strided_slice %1 {offsets = [1, 0, 0, 0, 0], sizes = [1, 1, 8, 8, 128], strides = [1, 1, 1, 1, 1]} : vector<2x2x9x9x128xbf16> to vector<1x1x8x8x128xbf16>
    %26 = vector.shape_cast %25 : vector<1x1x8x8x128xbf16> to vector<8x8x128xbf16>
    %27 = vector.shape_cast %26 : vector<8x8x128xbf16> to vector<64x128xbf16>
    %28 = vector.extract_strided_slice %2 {offsets = [3, 0, 0], sizes = [1, 128, 128], strides = [1, 1, 1]} : vector<9x128x128xbf16> to vector<1x128x128xbf16>
    %29 = vector.shape_cast %28 : vector<1x128x128xbf16> to vector<128x128xbf16>
    %cst_11 = arith.constant dense<0.000000e+00> : vector<64x128xf32>
    %30 = tpu.matmul %27, %29, %cst_11 {dimension_numbers = #tpu.dot_dimension_numbers<[1], [0], [0], [1], [0, 0, 1, 1], [], []>} : vector<64x128xbf16>, vector<128x128xbf16>, vector<64x128xf32> -> vector<64x128xf32>
    %31 = arith.addf %24, %30 : vector<64x128xf32>
    %32 = vector.extract_strided_slice %1 {offsets = [1, 1, 0, 0, 0], sizes = [1, 1, 8, 8, 128], strides = [1, 1, 1, 1, 1]} : vector<2x2x9x9x128xbf16> to vector<1x1x8x8x128xbf16>
    %33 = vector.shape_cast %32 : vector<1x1x8x8x128xbf16> to vector<8x8x128xbf16>
    %34 = vector.shape_cast %33 : vector<8x8x128xbf16> to vector<64x128xbf16>
    %35 = vector.extract_strided_slice %2 {offsets = [4, 0, 0], sizes = [1, 128, 128], strides = [1, 1, 1]} : vector<9x128x128xbf16> to vector<1x128x128xbf16>
    %36 = vector.shape_cast %35 : vector<1x128x128xbf16> to vector<128x128xbf16>
    %cst_12 = arith.constant dense<0.000000e+00> : vector<64x128xf32>
    %37 = tpu.matmul %34, %36, %cst_12 {dimension_numbers = #tpu.dot_dimension_numbers<[1], [0], [0], [1], [0, 0, 1, 1], [], []>} : vector<64x128xbf16>, vector<128x128xbf16>, vector<64x128xf32> -> vector<64x128xf32>
    %38 = arith.addf %31, %37 : vector<64x128xf32>
    %39 = vector.extract_strided_slice %1 {offsets = [1, 0, 0, 1, 0], sizes = [1, 1, 8, 8, 128], strides = [1, 1, 1, 1, 1]} : vector<2x2x9x9x128xbf16> to vector<1x1x8x8x128xbf16>
    %40 = vector.shape_cast %39 : vector<1x1x8x8x128xbf16> to vector<8x8x128xbf16>
    %41 = vector.shape_cast %40 : vector<8x8x128xbf16> to vector<64x128xbf16>
    %42 = vector.extract_strided_slice %2 {offsets = [5, 0, 0], sizes = [1, 128, 128], strides = [1, 1, 1]} : vector<9x128x128xbf16> to vector<1x128x128xbf16>
    %43 = vector.shape_cast %42 : vector<1x128x128xbf16> to vector<128x128xbf16>
    %cst_13 = arith.constant dense<0.000000e+00> : vector<64x128xf32>
    %44 = tpu.matmul %41, %43, %cst_13 {dimension_numbers = #tpu.dot_dimension_numbers<[1], [0], [0], [1], [0, 0, 1, 1], [], []>} : vector<64x128xbf16>, vector<128x128xbf16>, vector<64x128xf32> -> vector<64x128xf32>
    %45 = arith.addf %38, %44 : vector<64x128xf32>
    %46 = vector.extract_strided_slice %1 {offsets = [0, 0, 1, 0, 0], sizes = [1, 1, 8, 8, 128], strides = [1, 1, 1, 1, 1]} : vector<2x2x9x9x128xbf16> to vector<1x1x8x8x128xbf16>
    %47 = vector.shape_cast %46 : vector<1x1x8x8x128xbf16> to vector<8x8x128xbf16>
    %48 = vector.shape_cast %47 : vector<8x8x128xbf16> to vector<64x128xbf16>
    %49 = vector.extract_strided_slice %2 {offsets = [6, 0, 0], sizes = [1, 128, 128], strides = [1, 1, 1]} : vector<9x128x128xbf16> to vector<1x128x128xbf16>
    %50 = vector.shape_cast %49 : vector<1x128x128xbf16> to vector<128x128xbf16>
    %cst_14 = arith.constant dense<0.000000e+00> : vector<64x128xf32>
    %51 = tpu.matmul %48, %50, %cst_14 {dimension_numbers = #tpu.dot_dimension_numbers<[1], [0], [0], [1], [0, 0, 1, 1], [], []>} : vector<64x128xbf16>, vector<128x128xbf16>, vector<64x128xf32> -> vector<64x128xf32>
    %52 = arith.addf %45, %51 : vector<64x128xf32>
    %53 = vector.extract_strided_slice %1 {offsets = [0, 1, 1, 0, 0], sizes = [1, 1, 8, 8, 128], strides = [1, 1, 1, 1, 1]} : vector<2x2x9x9x128xbf16> to vector<1x1x8x8x128xbf16>
    %54 = vector.shape_cast %53 : vector<1x1x8x8x128xbf16> to vector<8x8x128xbf16>
    %55 = vector.shape_cast %54 : vector<8x8x128xbf16> to vector<64x128xbf16>
    %56 = vector.extract_strided_slice %2 {offsets = [7, 0, 0], sizes = [1, 128, 128], strides = [1, 1, 1]} : vector<9x128x128xbf16> to vector<1x128x128xbf16>
    %57 = vector.shape_cast %56 : vector<1x128x128xbf16> to vector<128x128xbf16>
    %cst_15 = arith.constant dense<0.000000e+00> : vector<64x128xf32>
    %58 = tpu.matmul %55, %57, %cst_15 {dimension_numbers = #tpu.dot_dimension_numbers<[1], [0], [0], [1], [0, 0, 1, 1], [], []>} : vector<64x128xbf16>, vector<128x128xbf16>, vector<64x128xf32> -> vector<64x128xf32>
    %59 = arith.addf %52, %58 : vector<64x128xf32>
    %60 = vector.extract_strided_slice %1 {offsets = [0, 0, 1, 1, 0], sizes = [1, 1, 8, 8, 128], strides = [1, 1, 1, 1, 1]} : vector<2x2x9x9x128xbf16> to vector<1x1x8x8x128xbf16>
    %61 = vector.shape_cast %60 : vector<1x1x8x8x128xbf16> to vector<8x8x128xbf16>
    %62 = vector.shape_cast %61 : vector<8x8x128xbf16> to vector<64x128xbf16>
    %63 = vector.extract_strided_slice %2 {offsets = [8, 0, 0], sizes = [1, 128, 128], strides = [1, 1, 1]} : vector<9x128x128xbf16> to vector<1x128x128xbf16>
    %64 = vector.shape_cast %63 : vector<1x128x128xbf16> to vector<128x128xbf16>
    %cst_16 = arith.constant dense<0.000000e+00> : vector<64x128xf32>
    %65 = tpu.matmul %62, %64, %cst_16 {dimension_numbers = #tpu.dot_dimension_numbers<[1], [0], [0], [1], [0, 0, 1, 1], [], []>} : vector<64x128xbf16>, vector<128x128xbf16>, vector<64x128xf32> -> vector<64x128xf32>
    %66 = arith.addf %59, %65 : vector<64x128xf32>
    %67 = vector.shape_cast %66 : vector<64x128xf32> to vector<1x8x8x128xf32>
    %68 = arith.truncf %67 : vector<1x8x8x128xf32> to vector<1x8x8x128xbf16>
    %c0_17 = arith.constant 0 : index
    %c0_18 = arith.constant 0 : index
    %c0_19 = arith.constant 0 : index
    %c0_20 = arith.constant 0 : index
    %69 = vector.load %arg4[%c0_17, %c0_18, %c0_19, %c0_20] : memref<1x8x8x128xbf16, #tpu.memory_space<vmem>>, vector<1x8x8x128xbf16>
    tpu.vector_store %arg4[%c0_17, %c0_18, %c0_19, %c0_20], %68 {strides = array<i32>} : memref<1x8x8x128xbf16, #tpu.memory_space<vmem>>, vector<1x8x8x128xbf16>,
    %cst_21 = arith.constant dense<0.000000e+00> : vector<128xf32>
    %70 = vector.multi_reduction <add>, %66, %cst_21 [0] : vector<64x128xf32> to vector<128xf32>
    %71 = vector.shape_cast %70 : vector<128xf32> to vector<1x128xf32>
    %72 = arith.mulf %66, %66 : vector<64x128xf32>
    %cst_22 = arith.constant dense<0.000000e+00> : vector<128xf32>
    %73 = vector.multi_reduction <add>, %72, %cst_22 [0] : vector<64x128xf32> to vector<128xf32>
    %74 = vector.shape_cast %73 : vector<128xf32> to vector<1x128xf32>
    %cst_23 = arith.constant 0.000000e+00 : f32
    %75 = vector.broadcast %cst_23 : f32 to vector<6x128xf32>
    %76 = tpu.concatenate %71, %74, %75 in 0 : vector<1x128xf32>, vector<1x128xf32>, vector<6x128xf32> -> vector<8x128xf32>
    %77 = vector.shape_cast %76 : vector<8x128xf32> to vector<1x8x128xf32>
    %c0_24 = arith.constant 0 : index
    %c0_25 = arith.constant 0 : index
    %c0_26 = arith.constant 0 : index
    %78 = vector.load %arg5[%c0_24, %c0_25, %c0_26] : memref<1x8x128xf32, #tpu.memory_space<vmem>>, vector<1x8x128xf32>
    tpu.vector_store %arg5[%c0_24, %c0_25, %c0_26], %77 {strides = array<i32>} : memref<1x8x128xf32, #tpu.memory_space<vmem>>, vector<1x8x128xf32>,
    %79 = vector.extract_strided_slice %1 {offsets = [1, 1, 0, 0, 0], sizes = [1, 1, 8, 8, 128], strides = [1, 1, 1, 1, 1]} : vector<2x2x9x9x128xbf16> to vector<1x1x8x8x128xbf16>
    %80 = vector.shape_cast %79 : vector<1x1x8x8x128xbf16> to vector<8x8x128xbf16>
    %81 = vector.shape_cast %80 : vector<8x8x128xbf16> to vector<64x128xbf16>
    %c0_27 = arith.constant 0 : index
    %c0_28 = arith.constant 0 : index
    %82 = vector.load %arg3[%c0_27, %c0_28] : memref<128x128xbf16, #tpu.memory_space<vmem>>, vector<128x128xbf16>
    %cst_29 = arith.constant dense<0.000000e+00> : vector<64x128xf32>
    %83 = tpu.matmul %81, %82, %cst_29 {dimension_numbers = #tpu.dot_dimension_numbers<[1], [0], [0], [1], [0, 0, 1, 1], [], []>} : vector<64x128xbf16>, vector<128x128xbf16>, vector<64x128xf32> -> vector<64x128xf32>
    %84 = vector.shape_cast %83 : vector<64x128xf32> to vector<1x8x8x128xf32>
    %85 = arith.truncf %84 : vector<1x8x8x128xf32> to vector<1x8x8x128xbf16>
    %c0_30 = arith.constant 0 : index
    %c0_31 = arith.constant 0 : index
    %c0_32 = arith.constant 0 : index
    %c0_33 = arith.constant 0 : index
    %86 = vector.load %arg6[%c0_30, %c0_31, %c0_32, %c0_33] : memref<1x8x8x128xbf16, #tpu.memory_space<vmem>>, vector<1x8x8x128xbf16>
    tpu.vector_store %arg6[%c0_30, %c0_31, %c0_32, %c0_33], %85 {strides = array<i32>} : memref<1x8x8x128xbf16, #tpu.memory_space<vmem>>, vector<1x8x8x128xbf16>,
    %cst_34 = arith.constant dense<0.000000e+00> : vector<128xf32>
    %87 = vector.multi_reduction <add>, %83, %cst_34 [0] : vector<64x128xf32> to vector<128xf32>
    %88 = vector.shape_cast %87 : vector<128xf32> to vector<1x128xf32>
    %89 = arith.mulf %83, %83 : vector<64x128xf32>
    %cst_35 = arith.constant dense<0.000000e+00> : vector<128xf32>
    %90 = vector.multi_reduction <add>, %89, %cst_35 [0] : vector<64x128xf32> to vector<128xf32>
    %91 = vector.shape_cast %90 : vector<128xf32> to vector<1x128xf32>
    %cst_36 = arith.constant 0.000000e+00 : f32
    %92 = vector.broadcast %cst_36 : f32 to vector<6x128xf32>
    %93 = tpu.concatenate %88, %91, %92 in 0 : vector<1x128xf32>, vector<1x128xf32>, vector<6x128xf32> -> vector<8x128xf32>
    %94 = vector.shape_cast %93 : vector<8x128xf32> to vector<1x8x128xf32>
    %c0_37 = arith.constant 0 : index
    %c0_38 = arith.constant 0 : index
    %c0_39 = arith.constant 0 : index
    %95 = vector.load %arg7[%c0_37, %c0_38, %c0_39] : memref<1x8x128xf32, #tpu.memory_space<vmem>>, vector<1x8x128xf32>
    tpu.vector_store %arg7[%c0_37, %c0_38, %c0_39], %94 {strides = array<i32>} : memref<1x8x128xf32, #tpu.memory_space<vmem>>, vector<1x8x128xf32>,
    return
  }
  func.func @transform_0(%arg0: i32) -> (i32, i32, i32, i32, i32, i32) {
    %c0_i32 = arith.constant 0 : i32
    %c0_i32_0 = arith.constant 0 : i32
    %c0_i32_1 = arith.constant 0 : i32
    %c0_i32_2 = arith.constant 0 : i32
    %c0_i32_3 = arith.constant 0 : i32
    %c0_i32_4 = arith.constant 0 : i32
    return %arg0, %c0_i32, %c0_i32_0, %c0_i32_1, %c0_i32_2, %c0_i32_3 : i32, i32, i32, i32, i32, i32
  }
  func.func @transform_1(%arg0: i32) -> (i32, i32, i32) {
    %c0_i32 = arith.constant 0 : i32
    %c0_i32_0 = arith.constant 0 : i32
    %c0_i32_1 = arith.constant 0 : i32
    %c0_i32_2 = arith.constant 0 : i32
    return %c0_i32, %c0_i32_0, %c0_i32_1 : i32, i32, i32
  }
  func.func @transform_2(%arg0: i32) -> (i32, i32) {
    %c0_i32 = arith.constant 0 : i32
    %c0_i32_0 = arith.constant 0 : i32
    %c0_i32_1 = arith.constant 0 : i32
    return %c0_i32, %c0_i32_0 : i32, i32
  }
  func.func @transform_3(%arg0: i32) -> (i32, i32, i32, i32) {
    %c0_i32 = arith.constant 0 : i32
    %c0_i32_0 = arith.constant 0 : i32
    %c0_i32_1 = arith.constant 0 : i32
    %c0_i32_2 = arith.constant 0 : i32
    return %arg0, %c0_i32, %c0_i32_0, %c0_i32_1 : i32, i32, i32, i32
  }
  func.func @transform_4(%arg0: i32) -> (i32, i32, i32) {
    %c0_i32 = arith.constant 0 : i32
    %c0_i32_0 = arith.constant 0 : i32
    %c0_i32_1 = arith.constant 0 : i32
    return %arg0, %c0_i32, %c0_i32_0 : i32, i32, i32
  }
  func.func @transform_5(%arg0: i32) -> (i32, i32, i32, i32) {
    %c0_i32 = arith.constant 0 : i32
    %c0_i32_0 = arith.constant 0 : i32
    %c0_i32_1 = arith.constant 0 : i32
    %c0_i32_2 = arith.constant 0 : i32
    return %arg0, %c0_i32, %c0_i32_0, %c0_i32_1 : i32, i32, i32, i32
  }
  func.func @transform_6(%arg0: i32) -> (i32, i32, i32) {
    %c0_i32 = arith.constant 0 : i32
    %c0_i32_0 = arith.constant 0 : i32
    %c0_i32_1 = arith.constant 0 : i32
    return %arg0, %c0_i32, %c0_i32_0 : i32, i32, i32
  }
}

</mosaic_0001>

<llo_original>
// kernel: tpu_custom_call.1
$region0: #{tpu_custom_call.1}
  #allocation0 [shape = 'u32[]', space=smem, size = 0x4, offset = 0x4, fixed_abs, tag = 'smem constant byte address 0x4 - core index']
  #allocation1 [shape = 'u32[144,128]{1,0:T(1,128)}', space=vmem, size = 0x12000, scoped, tag = 'internal scratch']
  %s0 = inlined_call_operand.vmem [shape: bf16[2,2,2,9,9,128], index: 0, kind: input, shape index: {}]
  %s1 = inlined_call_operand.vmem [shape: bf16[9,128,128], index: 1, kind: input, shape index: {}]
  %s2 = inlined_call_operand.vmem [shape: bf16[128,128], index: 2, kind: input, shape index: {}]
  %s3 = inlined_call_operand.hbm [shape: bf16[2,8,8,128], index: 3, kind: output, shape index: {0}]
  %s4 = inlined_call_operand.hbm [shape: f32[2,8,128], index: 4, kind: output, shape index: {1}]
  %s5 = inlined_call_operand.hbm [shape: bf16[2,8,8,128], index: 5, kind: output, shape index: {2}]
  %s6 = inlined_call_operand.hbm [shape: f32[2,8,128], index: 6, kind: output, shape index: {3}]
  %7 = xla_tuple %s3, %s4, %s5, %s6
  %s8 = sld [smem:[#allocation0]]
  $region69: #{tpu_custom_call.1} parent=0
    _
  %s10 = ssub.s32 1, %s8
  %s11 = scalar_select 0, %s10, %s8
  $region1: #{tpu_custom_call.1} parent=0
    #allocation2 [shape = 'u8[32768]{0}', space=vmem, size = 0x8000, scoped, tag = 'output window, operand 0']
    #allocation3 [shape = 's32[2]{0}', space=sflag, size = 0x8, scoped, tag = 'scoped memory for tpu_custom_call.1']
    #allocation4 [shape = 'u8[8192]{0}', space=vmem, size = 0x2000, scoped, tag = 'output window, operand 1']
    #allocation5 [shape = 's32[2]{0}', space=sflag, size = 0x8, scoped, tag = 'scoped memory for tpu_custom_call.1']
    #allocation6 [shape = 'u8[32768]{0}', space=vmem, size = 0x8000, scoped, tag = 'output window, operand 2']
    #allocation7 [shape = 'u8[8192]{0}', space=vmem, size = 0x2000, scoped, tag = 'output window, operand 3']
    #allocation8 [shape = 's32[2]{0}', space=sflag, size = 0x8, scoped, tag = 'scoped memory for tpu_custom_call.1']
    %12 = vsyncpa [#allocation3], 0
    %s13 = scalar_lea.sflag [#allocation3], 1
    %14 = vsyncpa %s13, 0
    %15 = vsyncpa [#allocation5], 0
    %s16 = scalar_lea.sflag [#allocation5], 1
    %17 = vsyncpa %s16, 0
    %18 = vsyncpa [#allocation8], 0
    %s19 = scalar_lea.sflag [#allocation8], 1
    %20 = vsyncpa %s19, 0
    loop: start=0, step=1, limit=4
    $region2: #{tpu_custom_call.1} parent=1 // loop_pre_header
      _
    $region3: #{tpu_custom_call.1} parent=1 // loop_header
      %s22 = sphi 0, %s26
      %p23 = scmp.ge.s32.totalorder %s22, 4
      %s32 = sphi 0, %s34
      %s35 = sphi 0, %s32
      %s36 = sphi 0, %s35
      %s52 = sphi 0, %s36
      %s56 = sphi 0, %s56
      %s58 = sphi 0, %s56
      %s59 = sphi 0, %s58
      %s73 = sphi 0, %s59
      %s77 = sphi 0, %s77
      %s79 = sphi 0, %s77
      %s80 = sphi 0, %s79
      %s94 = sphi 0, %s80
      %s100 = sphi 0, %s102
      %s103 = sphi 0, %s100
      %s104 = sphi 0, %s103
      %s120 = sphi 0, %s104
      %s126 = sphi 0, %s128
      %s129 = sphi 0, %s126
      %s130 = sphi 0, %s129
      %s146 = sphi 0, %s130
      %s152 = sphi 0, %s154
      %s155 = sphi 0, %s152
      %s156 = sphi 0, %s155
      %s172 = sphi 0, %s156
      %s178 = sphi 0, %s180
      %s181 = sphi 0, %s178
      %s182 = sphi 0, %s181
      %s198 = sphi 0, %s182
    $region4: #{tpu_custom_call.1} parent=1 // loop_header_branch
      %25 = sbr.rel (%p23) target = $region8
    $region5: #{tpu_custom_call.1} parent=1 // loop_body
      %s27 = ssub.s32 %s22, 1
      %s28 = ssub.s32 %s22, 2
      %s29 = sadd.s32 %s22, 1
      %s30 = ssub.s32 %s22, %s29
      %p31 = scmp.eq.s32.totalorder %s30, 0
      %s33 = sadd.s32 %s32, 1
      %s34 = scalar_select %p31, %s32, %s33
      %p37 = pneg %p31
      %p38 = scmp.eq.s32.totalorder %s22, 1
      %p39 = por %p37, %p38
      %p40 = scmp.ne.s32.totalorder %s32, %s35
      %p41 = scmp.eq.s32.totalorder %s22, 0
      %p42 = por %p40, %p41
      %p43 = scmp.ne.s32.totalorder %s32, %s35
      %p44 = scmp.eq.s32.totalorder %s27, 1
      %p45 = por %p43, %p44
      %p46 = scmp.ne.s32.totalorder %s35, %s36
      %p47 = scmp.eq.s32.totalorder %s27, 0
      %p48 = por %p46, %p47
      %p49 = scmp.ne.s32.totalorder %s35, %s36
      %p50 = scmp.eq.s32.totalorder %s28, 1
      %p51 = por %p49, %p50
      %p53 = scmp.ne.s32.totalorder %s36, %s52
      %p54 = scmp.eq.s32.totalorder %s28, 0
      %p55 = por %p53, %p54
      %s57 = sadd.s32 %s56, 1
      %p60 = scmp.eq.s32.totalorder %s22, 1
      %p61 = scmp.ne.s32.totalorder %s56, %s58
      %p62 = scmp.eq.s32.totalorder %s22, 0
      %p63 = por %p61, %p62
      %p64 = scmp.ne.s32.totalorder %s56, %s58
      %p65 = scmp.eq.s32.totalorder %s27, 1
      %p66 = por %p64, %p65
      %p67 = scmp.ne.s32.totalorder %s58, %s59
      %p68 = scmp.eq.s32.totalorder %s27, 0
      %p69 = por %p67, %p68
      %p70 = scmp.ne.s32.totalorder %s58, %s59
      %p71 = scmp.eq.s32.totalorder %s28, 1
      %p72 = por %p70, %p71
      %p74 = scmp.ne.s32.totalorder %s59, %s73
      %p75 = scmp.eq.s32.totalorder %s28, 0
      %p76 = por %p74, %p75
      %s78 = sadd.s32 %s77, 1
      %p81 = scmp.eq.s32.totalorder %s22, 1
      %p82 = scmp.ne.s32.totalorder %s77, %s79
      %p83 = scmp.eq.s32.totalorder %s22, 0
      %p84 = por %p82, %p83
      %p85 = scmp.ne.s32.totalorder %s77, %s79
      %p86 = scmp.eq.s32.totalorder %s27, 1
      %p87 = por %p85, %p86
      %p88 = scmp.ne.s32.totalorder %s79, %s80
      %p89 = scmp.eq.s32.totalorder %s27, 0
      %p90 = por %p88, %p89
      %p91 = scmp.ne.s32.totalorder %s79, %s80
      %p92 = scmp.eq.s32.totalorder %s28, 1
      %p93 = por %p91, %p92
      %p95 = scmp.ne.s32.totalorder %s80, %s94
      %p96 = scmp.eq.s32.totalorder %s28, 0
      %p97 = por %p95, %p96
      %s98 = ssub.s32 %s22, %s29
      %p99 = scmp.eq.s32.totalorder %s98, 0
      %s101 = sadd.s32 %s100, 1
      %s102 = scalar_select %p99, %s100, %s101
      %p105 = pneg %p99
      %p106 = scmp.eq.s32.totalorder %s22, 1
      %p107 = por %p105, %p106
      %p108 = scmp.ne.s32.totalorder %s100, %s103
      %p109 = scmp.eq.s32.totalorder %s22, 0
      %p110 = por %p108, %p109
      %p111 = scmp.ne.s32.totalorder %s100, %s103
      %p112 = scmp.eq.s32.totalorder %s27, 1
      %p113 = por %p111, %p112
      %p114 = scmp.ne.s32.totalorder %s103, %s104
      %p115 = scmp.eq.s32.totalorder %s27, 0
      %p116 = por %p114, %p115
      %p117 = scmp.ne.s32.totalorder %s103, %s104
      %p118 = scmp.eq.s32.totalorder %s28, 1
      %p119 = por %p117, %p118
      %p121 = scmp.ne.s32.totalorder %s104, %s120
      %p122 = scmp.eq.s32.totalorder %s28, 0
      %p123 = por %p121, %p122
      %s124 = ssub.s32 %s22, %s29
      %p125 = scmp.eq.s32.totalorder %s124, 0
      %s127 = sadd.s32 %s126, 1
      %s128 = scalar_select %p125, %s126, %s127
      %p131 = pneg %p125
      %p132 = scmp.eq.s32.totalorder %s22, 1
      %p133 = por %p131, %p132
      %p134 = scmp.ne.s32.totalorder %s126, %s129
      %p135 = scmp.eq.s32.totalorder %s22, 0
      %p136 = por %p134, %p135
      %p137 = scmp.ne.s32.totalorder %s126, %s129
      %p138 = scmp.eq.s32.totalorder %s27, 1
      %p139 = por %p137, %p138
      %p140 = scmp.ne.s32.totalorder %s129, %s130
      %p141 = scmp.eq.s32.totalorder %s27, 0
      %p142 = por %p140, %p141
      %p143 = scmp.ne.s32.totalorder %s129, %s130
      %p144 = scmp.eq.s32.totalorder %s28, 1
      %p145 = por %p143, %p144
      %p147 = scmp.ne.s32.totalorder %s130, %s146
      %p148 = scmp.eq.s32.totalorder %s28, 0
      %p149 = por %p147, %p148
      %s150 = ssub.s32 %s22, %s29
      %p151 = scmp.eq.s32.totalorder %s150, 0
      %s153 = sadd.s32 %s152, 1
      %s154 = scalar_select %p151, %s152, %s153
      %p157 = pneg %p151
      %p158 = scmp.eq.s32.totalorder %s22, 1
      %p159 = por %p157, %p158
      %p160 = scmp.ne.s32.totalorder %s152, %s155
      %p161 = scmp.eq.s32.totalorder %s22, 0
      %p162 = por %p160, %p161
      %p163 = scmp.ne.s32.totalorder %s152, %s155
      %p164 = scmp.eq.s32.totalorder %s27, 1
      %p165 = por %p163, %p164
      %p166 = scmp.ne.s32.totalorder %s155, %s156
      %p167 = scmp.eq.s32.totalorder %s27, 0
      %p168 = por %p166, %p167
      %p169 = scmp.ne.s32.totalorder %s155, %s156
      %p170 = scmp.eq.s32.totalorder %s28, 1
      %p171 = por %p169, %p170
      %p173 = scmp.ne.s32.totalorder %s156, %s172
      %p174 = scmp.eq.s32.totalorder %s28, 0
      %p175 = por %p173, %p174
      %s176 = ssub.s32 %s22, %s29
      %p177 = scmp.eq.s32.totalorder %s176, 0
      %s179 = sadd.s32 %s178, 1
      %s180 = scalar_select %p177, %s178, %s179
      %p183 = pneg %p177
      %p184 = scmp.eq.s32.totalorder %s22, 1
      %p185 = por %p183, %p184
      %p186 = scmp.ne.s32.totalorder %s178, %s181
      %p187 = scmp.eq.s32.totalorder %s22, 0
      %p188 = por %p186, %p187
      %p189 = scmp.ne.s32.totalorder %s178, %s181
      %p190 = scmp.eq.s32.totalorder %s27, 1
      %p191 = por %p189, %p190
      %p192 = scmp.ne.s32.totalorder %s181, %s182
      %p193 = scmp.eq.s32.totalorder %s27, 0
      %p194 = por %p192, %p193
      %p195 = scmp.ne.s32.totalorder %s181, %s182
      %p196 = scmp.eq.s32.totalorder %s28, 1
      %p197 = por %p195, %p196
      %p199 = scmp.ne.s32.totalorder %s182, %s198
      %p200 = scmp.eq.s32.totalorder %s28, 0
      %p201 = por %p199, %p200
      %p202 = scmp.le.s32.totalorder 1, %s22
      %p203 = scmp.lt.s32.totalorder %s22, 3
      %p204 = pnand %p202, %p203
      %p205 = pneg %p204
      // Predicated region
      $region9: #{tpu_custom_call.1} parent=5 // pred_check
        _
      $region10: #{tpu_custom_call.1} parent=5 // pred_check_branch
        %207 = sbr.rel (%p204) target = $region12
      $region11: #{tpu_custom_call.1} parent=5 // pred_region
        %s208 = ssub.s32 %s22, 1
        // Predicated region
        $region13: #{tpu_custom_call.1} parent=11 // pred_check
          %p209 = pneg %p69
        $region14: #{tpu_custom_call.1} parent=11 // pred_check_branch
          %211 = sbr.rel (%p209) target = $region16
        $region15: #{tpu_custom_call.1} parent=11 // pred_region
          _
        $region16: #{tpu_custom_call.1} parent=11 // pred_fallthru
          _
        // Predicated region
        $region17: #{tpu_custom_call.1} parent=11 // pred_check
          %p212 = pneg %p90
        $region18: #{tpu_custom_call.1} parent=11 // pred_check_branch
          %214 = sbr.rel (%p212) target = $region20
        $region19: #{tpu_custom_call.1} parent=11 // pred_region
          _
        $region20: #{tpu_custom_call.1} parent=11 // pred_fallthru
          _
      $region12: #{tpu_custom_call.1} parent=5 // pred_fallthru
        _
      %p215 = scmp.lt.s32.totalorder %s22, 2
      // Predicated region
      $region21: #{tpu_custom_call.1} parent=5 // pred_check
        %p216 = pneg %p215
      $region22: #{tpu_custom_call.1} parent=5 // pred_check_branch
        %218 = sbr.rel (%p216) target = $region24
      $region23: #{tpu_custom_call.1} parent=5 // pred_region
        // Predicated region
        $region25: #{tpu_custom_call.1} parent=23 // pred_check
          %p219 = pneg %p42
        $region26: #{tpu_custom_call.1} parent=23 // pred_check_branch
          %221 = sbr.rel (%p219) target = $region28
        $region27: #{tpu_custom_call.1} parent=23 // pred_region
          %p222 = scmp.lt.s32.totalorder %s22, 1
          %s223 = scalar_select %p222, %s22, 1
          %s224 = smul.addr %s223, 72
          %s225 = smul.addr %s224, 4
          %s226 = scalar_lea.vmem %s0, %s225
        $region28: #{tpu_custom_call.1} parent=23 // pred_fallthru
          _
      $region24: #{tpu_custom_call.1} parent=5 // pred_fallthru
        _
      %p227 = scmp.le.s32.totalorder 1, %s22
      %p228 = scmp.lt.s32.totalorder %s22, 3
      %p229 = pnand %p227, %p228
      %p230 = pneg %p229
      // Predicated region
      $region29: #{tpu_custom_call.1} parent=5 // pred_check
        _
      $region30: #{tpu_custom_call.1} parent=5 // pred_check_branch
        %232 = sbr.rel (%p229) target = $region32
      $region31: #{tpu_custom_call.1} parent=5 // pred_region
        %s233 = ssub.s32 %s22, 1
        %p234 = scmp.lt.s32.totalorder %s27, 1
        %s235 = scalar_select %p234, %s27, 1
        %s236 = smul.addr %s235, 72
        %s237 = smul.addr %s236, 4
        %s238 = scalar_lea.vmem %s0, %s237
        %p239 = pneg %p48
        %p240 = pneg %p45
        %p241 = pneg %p69
        %p242 = pneg %p66
        %p243 = pneg %p90
        %p244 = pneg %p87
        %p245 = pneg %p116
        %p246 = pneg %p113
        %s247 = sand.u32 %s103, 1
        %s248 = scalar_lea.sflag [#allocation3], %s247
        %s249 = sand.u32 %s103, 1
        %s250 = smul.addr %s249, 32
        %s251 = scalar_lea.vmem [#allocation2], %s250
        %p252 = pneg %p142
        %p253 = pneg %p139
        %s254 = sand.u32 %s27, 1
        %s255 = scalar_lea.sflag [#allocation5], %s254
        %s256 = sand.u32 %s129, 1
        %s257 = smul.addr %s256, 8
        %s258 = scalar_lea.vmem [#allocation4], %s257
        %p259 = pneg %p168
        %p260 = pneg %p165
        %s261 = sand.u32 %s27, 1
        %s262 = scalar_lea.sflag [#allocation5], %s261
        %s263 = sand.u32 %s155, 1
        %s264 = smul.addr %s263, 32
        %s265 = scalar_lea.vmem [#allocation6], %s264
        %p266 = pneg %p194
        %p267 = pneg %p191
        %s268 = sand.u32 %s181, 1
        %s269 = scalar_lea.sflag [#allocation8], %s268
        %s270 = sand.u32 %s181, 1
        %s271 = smul.addr %s270, 8
        %s272 = scalar_lea.vmem [#allocation7], %s271
        %p273 = scmp.lt.s32.totalorder %s27, 1
        %s274 = scalar_select %p273, %s27, 1
        %s275 = smul.addr %s274, 72
        %s276 = smul.addr %s275, 4
        %s277 = scalar_lea.vmem %s0, %s276
        %v279 = vld [vmem:[%s277] sm:$0xf]
        %v280 = vld [vmem:[%s277 + $0x4] sm:$0x1]
        %v281 = vld [vmem:[%s277 + $0x8] sm:$0xf]
        %v282 = vld [vmem:[%s277 + $0xc] sm:$0x1]
        %v283 = vld [vmem:[%s277 + $0x10] sm:$0xf]
        %v284 = vld [vmem:[%s277 + $0x14] sm:$0x1]
        %v285 = vld [vmem:[%s277 + $0x18] sm:$0xf]
        %v286 = vld [vmem:[%s277 + $0x1c] sm:$0x1]
        %v287 = vld [vmem:[%s277 + $0x20] sm:$0xf]
        %v288 = vld [vmem:[%s277 + $0x24] sm:$0x1]
        %v289 = vld [vmem:[%s277 + $0x28] sm:$0xf]
        %v290 = vld [vmem:[%s277 + $0x2c] sm:$0x1]
        %v291 = vld [vmem:[%s277 + $0x30] sm:$0xf]
        %v292 = vld [vmem:[%s277 + $0x34] sm:$0x1]
        %v293 = vld [vmem:[%s277 + $0x38] sm:$0xf]
        %v294 = vld [vmem:[%s277 + $0x3c] sm:$0x1]
        %v295 = vld [vmem:[%s277 + $0x40] sm:$0xf]
        %v296 = vld [vmem:[%s277 + $0x44] sm:$0x1]
        %v297 = vld [vmem:[%s277 + $0x48] sm:$0xf]
        %v298 = vld [vmem:[%s277 + $0x50] sm:$0xf]
        %v299 = vld [vmem:[%s277 + $0x58] sm:$0xf]
        %v300 = vld [vmem:[%s277 + $0x60] sm:$0xf]
        %v301 = vld [vmem:[%s277 + $0x68] sm:$0xf]
        %v302 = vld [vmem:[%s277 + $0x70] sm:$0xf]
        %v303 = vld [vmem:[%s277 + $0x78] sm:$0xf]
        %v304 = vld [vmem:[%s277 + $0x80] sm:$0xf]
        %v305 = vld [vmem:[%s277 + $0x88] sm:$0xf]
        %v306 = vld [vmem:[%s277 + $0x90] sm:$0xf]
        %v307 = vld [vmem:[%s277 + $0x94] sm:$0x1]
        %v308 = vld [vmem:[%s277 + $0x98] sm:$0xf]
        %v309 = vld [vmem:[%s277 + $0x9c] sm:$0x1]
        %v310 = vld [vmem:[%s277 + $0xa0] sm:$0xf]
        %v311 = vld [vmem:[%s277 + $0xa4] sm:$0x1]
        %v312 = vld [vmem:[%s277 + $0xa8] sm:$0xf]
        %v313 = vld [vmem:[%s277 + $0xac] sm:$0x1]
        %v314 = vld [vmem:[%s277 + $0xb0] sm:$0xf]
        %v315 = vld [vmem:[%s277 + $0xb4] sm:$0x1]
        %v316 = vld [vmem:[%s277 + $0xb8] sm:$0xf]
        %v317 = vld [vmem:[%s277 + $0xbc] sm:$0x1]
        %v318 = vld [vmem:[%s277 + $0xc0] sm:$0xf]
        %v319 = vld [vmem:[%s277 + $0xc4] sm:$0x1]
        %v320 = vld [vmem:[%s277 + $0xc8] sm:$0xf]
        %v321 = vld [vmem:[%s277 + $0xcc] sm:$0x1]
        %v322 = vld [vmem:[%s277 + $0xd8] sm:$0xf]
        %v323 = vld [vmem:[%s277 + $0xe0] sm:$0xf]
        %v324 = vld [vmem:[%s277 + $0xe8] sm:$0xf]
        %v325 = vld [vmem:[%s277 + $0xf0] sm:$0xf]
        %v326 = vld [vmem:[%s277 + $0xf8] sm:$0xf]
        %v327 = vld [vmem:[%s277 + $0x100] sm:$0xf]
        %v328 = vld [vmem:[%s277 + $0x108] sm:$0xf]
        %v329 = vld [vmem:[%s277 + $0x110] sm:$0xf]
        %v330 = vld [vmem:[%s1] sm:$0xf]
        %v331 = vld [vmem:[%s1 + $0x4] sm:$0xf]
        %v332 = vld [vmem:[%s1 + $0x8] sm:$0xf]
        %v333 = vld [vmem:[%s1 + $0xc] sm:$0xf]
        %v334 = vld [vmem:[%s1 + $0x10] sm:$0xf]
        %v335 = vld [vmem:[%s1 + $0x14] sm:$0xf]
        %v336 = vld [vmem:[%s1 + $0x18] sm:$0xf]
        %v337 = vld [vmem:[%s1 + $0x1c] sm:$0xf]
        %v338 = vld [vmem:[%s1 + $0x20] sm:$0xf]
        %v339 = vld [vmem:[%s1 + $0x24] sm:$0xf]
        %v340 = vld [vmem:[%s1 + $0x28] sm:$0xf]
        %v341 = vld [vmem:[%s1 + $0x2c] sm:$0xf]
        %v342 = vld [vmem:[%s1 + $0x30] sm:$0xf]
        %v343 = vld [vmem:[%s1 + $0x34] sm:$0xf]
        %v344 = vld [vmem:[%s1 + $0x38] sm:$0xf]
        %v345 = vld [vmem:[%s1 + $0x3c] sm:$0xf]
        %v346 = vld [vmem:[%s1 + $0x40] sm:$0xf]
        %v347 = vld [vmem:[%s1 + $0x44] sm:$0xf]
        %v348 = vld [vmem:[%s1 + $0x48] sm:$0xf]
        %v349 = vld [vmem:[%s1 + $0x4c] sm:$0xf]
        %v350 = vld [vmem:[%s1 + $0x50] sm:$0xf]
        %v351 = vld [vmem:[%s1 + $0x54] sm:$0xf]
        %v352 = vld [vmem:[%s1 + $0x58] sm:$0xf]
        %v353 = vld [vmem:[%s1 + $0x5c] sm:$0xf]
        %v354 = vld [vmem:[%s1 + $0x60] sm:$0xf]
        %v355 = vld [vmem:[%s1 + $0x64] sm:$0xf]
        %v356 = vld [vmem:[%s1 + $0x68] sm:$0xf]
        %v357 = vld [vmem:[%s1 + $0x6c] sm:$0xf]
        %v358 = vld [vmem:[%s1 + $0x70] sm:$0xf]
        %v359 = vld [vmem:[%s1 + $0x74] sm:$0xf]
        %v360 = vld [vmem:[%s1 + $0x78] sm:$0xf]
        %v361 = vld [vmem:[%s1 + $0x7c] sm:$0xf]
        %v362 = vld [vmem:[%s1 + $0x80] sm:$0xf]
        %v363 = vld [vmem:[%s1 + $0x84] sm:$0xf]
        %v364 = vld [vmem:[%s1 + $0x88] sm:$0xf]
        %v365 = vld [vmem:[%s1 + $0x8c] sm:$0xf]
        %v366 = vld [vmem:[%s1 + $0x90] sm:$0xf]
        %v367 = vld [vmem:[%s1 + $0x94] sm:$0xf]
        %v368 = vld [vmem:[%s1 + $0x98] sm:$0xf]
        %v369 = vld [vmem:[%s1 + $0x9c] sm:$0xf]
        %v370 = vld [vmem:[%s1 + $0xa0] sm:$0xf]
        %v371 = vld [vmem:[%s1 + $0xa4] sm:$0xf]
        %v372 = vld [vmem:[%s1 + $0xa8] sm:$0xf]
        %v373 = vld [vmem:[%s1 + $0xac] sm:$0xf]
        %v374 = vld [vmem:[%s1 + $0xb0] sm:$0xf]
        %v375 = vld [vmem:[%s1 + $0xb4] sm:$0xf]
        %v376 = vld [vmem:[%s1 + $0xb8] sm:$0xf]
        %v377 = vld [vmem:[%s1 + $0xbc] sm:$0xf]
        %v378 = vld [vmem:[%s1 + $0xc0] sm:$0xf]
        %v379 = vld [vmem:[%s1 + $0xc4] sm:$0xf]
        %v380 = vld [vmem:[%s1 + $0xc8] sm:$0xf]
        %v381 = vld [vmem:[%s1 + $0xcc] sm:$0xf]
        %v382 = vld [vmem:[%s1 + $0xd0] sm:$0xf]
        %v383 = vld [vmem:[%s1 + $0xd4] sm:$0xf]
        %v384 = vld [vmem:[%s1 + $0xd8] sm:$0xf]
        %v385 = vld [vmem:[%s1 + $0xdc] sm:$0xf]
        %v386 = vld [vmem:[%s1 + $0xe0] sm:$0xf]
        %v387 = vld [vmem:[%s1 + $0xe4] sm:$0xf]
        %v388 = vld [vmem:[%s1 + $0xe8] sm:$0xf]
        %v389 = vld [vmem:[%s1 + $0xec] sm:$0xf]
        %v390 = vld [vmem:[%s1 + $0xf0] sm:$0xf]
        %v391 = vld [vmem:[%s1 + $0xf4] sm:$0xf]
        %v392 = vld [vmem:[%s1 + $0xf8] sm:$0xf]
        %v393 = vld [vmem:[%s1 + $0xfc] sm:$0xf]
        %v394 = vld [vmem:[%s1 + $0x100] sm:$0xf]
        %v395 = vld [vmem:[%s1 + $0x104] sm:$0xf]
        %v396 = vld [vmem:[%s1 + $0x108] sm:$0xf]
        %v397 = vld [vmem:[%s1 + $0x10c] sm:$0xf]
        %v398 = vld [vmem:[%s1 + $0x110] sm:$0xf]
        %v399 = vld [vmem:[%s1 + $0x114] sm:$0xf]
        %v400 = vld [vmem:[%s1 + $0x118] sm:$0xf]
        %v401 = vld [vmem:[%s1 + $0x11c] sm:$0xf]
        %v402 = vld [vmem:[%s1 + $0x120] sm:$0xf]
        %v403 = vld [vmem:[%s1 + $0x124] sm:$0xf]
        %v404 = vld [vmem:[%s1 + $0x128] sm:$0xf]
        %v405 = vld [vmem:[%s1 + $0x12c] sm:$0xf]
        %v406 = vld [vmem:[%s1 + $0x130] sm:$0xf]
        %v407 = vld [vmem:[%s1 + $0x134] sm:$0xf]
        %v408 = vld [vmem:[%s1 + $0x138] sm:$0xf]
        %v409 = vld [vmem:[%s1 + $0x13c] sm:$0xf]
        %v410 = vld [vmem:[%s1 + $0x140] sm:$0xf]
        %v411 = vld [vmem:[%s1 + $0x144] sm:$0xf]
        %v412 = vld [vmem:[%s1 + $0x148] sm:$0xf]
        %v413 = vld [vmem:[%s1 + $0x14c] sm:$0xf]
        %v414 = vld [vmem:[%s1 + $0x150] sm:$0xf]
        %v415 = vld [vmem:[%s1 + $0x154] sm:$0xf]
        %v416 = vld [vmem:[%s1 + $0x158] sm:$0xf]
        %v417 = vld [vmem:[%s1 + $0x15c] sm:$0xf]
        %v418 = vld [vmem:[%s1 + $0x160] sm:$0xf]
        %v419 = vld [vmem:[%s1 + $0x164] sm:$0xf]
        %v420 = vld [vmem:[%s1 + $0x168] sm:$0xf]
        %v421 = vld [vmem:[%s1 + $0x16c] sm:$0xf]
        %v422 = vld [vmem:[%s1 + $0x170] sm:$0xf]
        %v423 = vld [vmem:[%s1 + $0x174] sm:$0xf]
        %v424 = vld [vmem:[%s1 + $0x178] sm:$0xf]
        %v425 = vld [vmem:[%s1 + $0x17c] sm:$0xf]
        %v426 = vld [vmem:[%s1 + $0x180] sm:$0xf]
        %v427 = vld [vmem:[%s1 + $0x184] sm:$0xf]
        %v428 = vld [vmem:[%s1 + $0x188] sm:$0xf]
        %v429 = vld [vmem:[%s1 + $0x18c] sm:$0xf]
        %v430 = vld [vmem:[%s1 + $0x190] sm:$0xf]
        %v431 = vld [vmem:[%s1 + $0x194] sm:$0xf]
        %v432 = vld [vmem:[%s1 + $0x198] sm:$0xf]
        %v433 = vld [vmem:[%s1 + $0x19c] sm:$0xf]
        %v434 = vld [vmem:[%s1 + $0x1a0] sm:$0xf]
        %v435 = vld [vmem:[%s1 + $0x1a4] sm:$0xf]
        %v436 = vld [vmem:[%s1 + $0x1a8] sm:$0xf]
        %v437 = vld [vmem:[%s1 + $0x1ac] sm:$0xf]
        %v438 = vld [vmem:[%s1 + $0x1b0] sm:$0xf]
        %v439 = vld [vmem:[%s1 + $0x1b4] sm:$0xf]
        %v440 = vld [vmem:[%s1 + $0x1b8] sm:$0xf]
        %v441 = vld [vmem:[%s1 + $0x1bc] sm:$0xf]
        %v442 = vld [vmem:[%s1 + $0x1c0] sm:$0xf]
        %v443 = vld [vmem:[%s1 + $0x1c4] sm:$0xf]
        %v444 = vld [vmem:[%s1 + $0x1c8] sm:$0xf]
        %v445 = vld [vmem:[%s1 + $0x1cc] sm:$0xf]
        %v446 = vld [vmem:[%s1 + $0x1d0] sm:$0xf]
        %v447 = vld [vmem:[%s1 + $0x1d4] sm:$0xf]
        %v448 = vld [vmem:[%s1 + $0x1d8] sm:$0xf]
        %v449 = vld [vmem:[%s1 + $0x1dc] sm:$0xf]
        %v450 = vld [vmem:[%s1 + $0x1e0] sm:$0xf]
        %v451 = vld [vmem:[%s1 + $0x1e4] sm:$0xf]
        %v452 = vld [vmem:[%s1 + $0x1e8] sm:$0xf]
        %v453 = vld [vmem:[%s1 + $0x1ec] sm:$0xf]
        %v454 = vld [vmem:[%s1 + $0x1f0] sm:$0xf]
        %v455 = vld [vmem:[%s1 + $0x1f4] sm:$0xf]
        %v456 = vld [vmem:[%s1 + $0x1f8] sm:$0xf]
        %v457 = vld [vmem:[%s1 + $0x1fc] sm:$0xf]
        %v458 = vld [vmem:[%s1 + $0x200] sm:$0xf]
        %v459 = vld [vmem:[%s1 + $0x204] sm:$0xf]
        %v460 = vld [vmem:[%s1 + $0x208] sm:$0xf]
        %v461 = vld [vmem:[%s1 + $0x20c] sm:$0xf]
        %v462 = vld [vmem:[%s1 + $0x210] sm:$0xf]
        %v463 = vld [vmem:[%s1 + $0x214] sm:$0xf]
        %v464 = vld [vmem:[%s1 + $0x218] sm:$0xf]
        %v465 = vld [vmem:[%s1 + $0x21c] sm:$0xf]
        %v466 = vld [vmem:[%s1 + $0x220] sm:$0xf]
        %v467 = vld [vmem:[%s1 + $0x224] sm:$0xf]
        %v468 = vld [vmem:[%s1 + $0x228] sm:$0xf]
        %v469 = vld [vmem:[%s1 + $0x22c] sm:$0xf]
        %v470 = vld [vmem:[%s1 + $0x230] sm:$0xf]
        %v471 = vld [vmem:[%s1 + $0x234] sm:$0xf]
        %v472 = vld [vmem:[%s1 + $0x238] sm:$0xf]
        %v473 = vld [vmem:[%s1 + $0x23c] sm:$0xf]
        %v482 = vunpack.c.l.b16 %v297
        %v483 = vunpack.c.l.b16 %v298
        %v484 = vunpack.c.l.b16 %v299
        %v485 = vunpack.c.l.b16 %v300
        %v486 = vunpack.c.l.b16 %v301
        %v487 = vunpack.c.l.b16 %v302
        %v488 = vunpack.c.l.b16 %v303
        %v489 = vunpack.c.l.b16 %v304
        %v490 = vpack.c.b16 %v483, %v482
        %v491 = vpack.c.b16 %v485, %v484
        %v492 = vpack.c.b16 %v487, %v486
        %v493 = vpack.c.b16 %v489, %v488
        %v514 = vunpack.c.l.b16 %v346
        %v515 = vunpack.c.l.b16 %v347
        %v516 = vunpack.c.l.b16 %v348
        %v517 = vunpack.c.l.b16 %v349
        %v518 = vunpack.c.l.b16 %v350
        %v519 = vunpack.c.l.b16 %v351
        %v520 = vunpack.c.l.b16 %v352
        %v521 = vunpack.c.l.b16 %v353
        %v522 = vunpack.c.l.b16 %v354
        %v523 = vunpack.c.l.b16 %v355
        %v524 = vunpack.c.l.b16 %v356
        %v525 = vunpack.c.l.b16 %v357
        %v526 = vunpack.c.l.b16 %v358
        %v527 = vunpack.c.l.b16 %v359
        %v528 = vunpack.c.l.b16 %v360
        %v529 = vunpack.c.l.b16 %v361
        %v530 = vpack.c.b16 %v515, %v514
        %v531 = vpack.c.b16 %v517, %v516
        %v532 = vpack.c.b16 %v519, %v518
        %v533 = vpack.c.b16 %v521, %v520
        %v534 = vpack.c.b16 %v523, %v522
        %v535 = vpack.c.b16 %v525, %v524
        %v536 = vpack.c.b16 %v527, %v526
        %v537 = vpack.c.b16 %v529, %v528
        %546 = vmatprep.subr.bf16.mxu0 0
        %547 = vmatpush1.bf16.msra.mxu0 %v537
        %548 = vmatprep.subr.bf16.mxu0 0
        %549 = vmatpush1.bf16.msra.mxu0 %v536
        %550 = vmatprep.subr.bf16.mxu0 0
        %551 = vmatpush1.bf16.msra.mxu0 %v535
        %552 = vmatprep.subr.bf16.mxu0 0
        %553 = vmatpush1.bf16.msra.mxu0 %v534
        %554 = vmatprep.subr.bf16.mxu0 0
        %555 = vmatpush1.bf16.msra.mxu0 %v533
        %556 = vmatprep.subr.bf16.mxu0 0
        %557 = vmatpush1.bf16.msra.mxu0 %v532
        %558 = vmatprep.subr.bf16.mxu0 0
        %559 = vmatpush1.bf16.msra.mxu0 %v531
        %560 = vmatprep.subr.bf16.mxu0 0
        %561 = vmatpush1.bf16.msra.mxu0 %v530
        %562 = vmatprep.subr.bf16.mxu0 0
        %563 = vmatpush2.bf16.msra.mxu0 0
        %564 = vmatprep.subr.bf16.mxu0 0
        %565 = vmatpush2.bf16.msra.mxu0 0
        %566 = vmatprep.subr.bf16.mxu0 0
        %567 = vmatpush2.bf16.msra.mxu0 0
        %568 = vmatprep.subr.bf16.mxu0 0
        %569 = vmatpush2.bf16.msra.mxu0 0
        %570 = vmatprep.subr.bf16.mxu0 0
        %571 = vmatpush2.bf16.msra.mxu0 0
        %572 = vmatprep.subr.bf16.mxu0 0
        %573 = vmatpush2.bf16.msra.mxu0 0
        %574 = vmatprep.subr.bf16.mxu0 0
        %575 = vmatpush2.bf16.msra.mxu0 0
        %576 = vmatprep.subr.bf16.mxu0 0
        %577 = vmatpush2.bf16.msra.mxu0 0
        %578 = vmatprep.mubr.bf16.mxu0 0
        %579 = vmatmul.mubr.bf16.gmra.mxu0 %v490
        %v580 = vpop.f32.mrf.mxu0
        %v581 = vadd.f32 0.0, %v580
        %v582 = vpop.f32.mrf.mxu0
        %v583 = vpop.f32.mrf.mxu0
        %v584 = vadd.f32 0.0, %v583
        %v585 = vpop.f32.mrf.mxu0
        %586 = vmatprep.mubr.bf16.mxu0 0
        %587 = vmatmul.mubr.bf16.gmra.mxu0 %v491
        %v588 = vpop.f32.mrf.mxu0
        %v589 = vadd.f32 0.0, %v588
        %v590 = vpop.f32.mrf.mxu0
        %v591 = vpop.f32.mrf.mxu0
        %v592 = vadd.f32 0.0, %v591
        %v593 = vpop.f32.mrf.mxu0
        %594 = vmatprep.mubr.bf16.mxu0 0
        %595 = vmatmul.mubr.bf16.gmra.mxu0 %v492
        %v596 = vpop.f32.mrf.mxu0
        %v597 = vadd.f32 0.0, %v596
        %v598 = vpop.f32.mrf.mxu0
        %v599 = vpop.f32.mrf.mxu0
        %v600 = vadd.f32 0.0, %v599
        %v601 = vpop.f32.mrf.mxu0
        %602 = vmatprep.mubr.bf16.mxu0 0
        %603 = vmatmul.mubr.bf16.gmra.mxu0 %v493
        %v604 = vpop.f32.mrf.mxu0
        %v605 = vadd.f32 0.0, %v604
        %v606 = vpop.f32.mrf.mxu0
        %v607 = vpop.f32.mrf.mxu0
        %v608 = vadd.f32 0.0, %v607
        %v609 = vpop.f32.mrf.mxu0
        %610 = vdwg.mxu0
        %v619 = vunpack.c.l.b16 %v279
        %v620 = vunpack.c.l.b16 %v281
        %v621 = vunpack.c.l.b16 %v283
        %v622 = vunpack.c.l.b16 %v285
        %v623 = vunpack.c.l.b16 %v287
        %v624 = vunpack.c.l.b16 %v289
        %v625 = vunpack.c.l.b16 %v291
        %v626 = vunpack.c.l.b16 %v293
        %v627 = vpack.c.b16 %v620, %v619
        %v628 = vpack.c.b16 %v622, %v621
        %v629 = vpack.c.b16 %v624, %v623
        %v630 = vpack.c.b16 %v626, %v625
        %v651 = vunpack.c.l.b16 %v330
        %v652 = vunpack.c.l.b16 %v331
        %v653 = vunpack.c.l.b16 %v332
        %v654 = vunpack.c.l.b16 %v333
        %v655 = vunpack.c.l.b16 %v334
        %v656 = vunpack.c.l.b16 %v335
        %v657 = vunpack.c.l.b16 %v336
        %v658 = vunpack.c.l.b16 %v337
        %v659 = vunpack.c.l.b16 %v338
        %v660 = vunpack.c.l.b16 %v339
        %v661 = vunpack.c.l.b16 %v340
        %v662 = vunpack.c.l.b16 %v341
        %v663 = vunpack.c.l.b16 %v342
        %v664 = vunpack.c.l.b16 %v343
        %v665 = vunpack.c.l.b16 %v344
        %v666 = vunpack.c.l.b16 %v345
        %v667 = vpack.c.b16 %v652, %v651
        %v668 = vpack.c.b16 %v654, %v653
        %v669 = vpack.c.b16 %v656, %v655
        %v670 = vpack.c.b16 %v658, %v657
        %v671 = vpack.c.b16 %v660, %v659
        %v672 = vpack.c.b16 %v662, %v661
        %v673 = vpack.c.b16 %v664, %v663
        %v674 = vpack.c.b16 %v666, %v665
        %683 = vmatprep.subr.bf16.mxu0 0
        %684 = vmatpush1.bf16.msra.mxu0 %v674
        %685 = vmatprep.subr.bf16.mxu0 0
        %686 = vmatpush1.bf16.msra.mxu0 %v673
        %687 = vmatprep.subr.bf16.mxu0 0
        %688 = vmatpush1.bf16.msra.mxu0 %v672
        %689 = vmatprep.subr.bf16.mxu0 0
        %690 = vmatpush1.bf16.msra.mxu0 %v671
        %691 = vmatprep.subr.bf16.mxu0 0
        %692 = vmatpush1.bf16.msra.mxu0 %v670
        %693 = vmatprep.subr.bf16.mxu0 0
        %694 = vmatpush1.bf16.msra.mxu0 %v669
        %695 = vmatprep.subr.bf16.mxu0 0
        %696 = vmatpush1.bf16.msra.mxu0 %v668
        %697 = vmatprep.subr.bf16.mxu0 0
        %698 = vmatpush1.bf16.msra.mxu0 %v667
        %699 = vmatprep.subr.bf16.mxu0 0
        %700 = vmatpush2.bf16.msra.mxu0 0
        %701 = vmatprep.subr.bf16.mxu0 0
        %702 = vmatpush2.bf16.msra.mxu0 0
        %703 = vmatprep.subr.bf16.mxu0 0
        %704 = vmatpush2.bf16.msra.mxu0 0
        %705 = vmatprep.subr.bf16.mxu0 0
        %706 = vmatpush2.bf16.msra.mxu0 0
        %707 = vmatprep.subr.bf16.mxu0 0
        %708 = vmatpush2.bf16.msra.mxu0 0
        %709 = vmatprep.subr.bf16.mxu0 0
        %710 = vmatpush2.bf16.msra.mxu0 0
        %711 = vmatprep.subr.bf16.mxu0 0
        %712 = vmatpush2.bf16.msra.mxu0 0
        %713 = vmatprep.subr.bf16.mxu0 0
        %714 = vmatpush2.bf16.msra.mxu0 0
        %715 = vmatprep.mubr.bf16.mxu0 0
        %716 = vmatmul.mubr.bf16.gmra.mxu0 %v627
        %v717 = vpop.f32.mrf.mxu0
        %v718 = vadd.f32 %v581, %v717
        %v719 = vpop.f32.mrf.mxu0
        %v720 = vpop.f32.mrf.mxu0
        %v721 = vadd.f32 %v584, %v720
        %v722 = vpop.f32.mrf.mxu0
        %723 = vmatprep.mubr.bf16.mxu0 0
        %724 = vmatmul.mubr.bf16.gmra.mxu0 %v628
        %v725 = vpop.f32.mrf.mxu0
        %v726 = vadd.f32 %v589, %v725
        %v727 = vpop.f32.mrf.mxu0
        %v728 = vpop.f32.mrf.mxu0
        %v729 = vadd.f32 %v592, %v728
        %v730 = vpop.f32.mrf.mxu0
        %731 = vmatprep.mubr.bf16.mxu0 0
        %732 = vmatmul.mubr.bf16.gmra.mxu0 %v629
        %v733 = vpop.f32.mrf.mxu0
        %v734 = vadd.f32 %v597, %v733
        %v735 = vpop.f32.mrf.mxu0
        %v736 = vpop.f32.mrf.mxu0
        %v737 = vadd.f32 %v600, %v736
        %v738 = vpop.f32.mrf.mxu0
        %739 = vmatprep.mubr.bf16.mxu0 0
        %740 = vmatmul.mubr.bf16.gmra.mxu0 %v630
        %v741 = vpop.f32.mrf.mxu0
        %v742 = vadd.f32 %v605, %v741
        %v743 = vpop.f32.mrf.mxu0
        %v744 = vpop.f32.mrf.mxu0
        %v745 = vadd.f32 %v608, %v744
        %v746 = vpop.f32.mrf.mxu0
        %747 = vdwg.mxu0
        %vm748 = vsmask.f32 3328
        %vm749 = vsmask.f32 7440
        %vm750 = vmor %vm748, %vm749
        %v752 = vshrl.u32 %v279, 16
        %v754 = vrot.slane %v752, 4
        %v755 = vshll.u32 %v279, 16
        %v757 = vrot.slane %v755, 5
        %v758 = vor.u32 %v754, %v757
        %v759 = vrot.slane %v758, 4
        %v761 = vshll.u32 %v280, 16
        %v763 = vrot.slane %v761, 5
        %v764 = vsel %vm750, %v759, %v763
        %v766 = vshrl.u32 %v281, 16
        %v768 = vrot.slane %v766, 4
        %v769 = vshll.u32 %v281, 16
        %v771 = vrot.slane %v769, 5
        %v772 = vor.u32 %v768, %v771
        %v773 = vrot.slane %v772, 4
        %v775 = vshll.u32 %v282, 16
        %v777 = vrot.slane %v775, 5
        %v778 = vsel %vm750, %v773, %v777
        %v780 = vshrl.u32 %v283, 16
        %v782 = vrot.slane %v780, 4
        %v783 = vshll.u32 %v283, 16
        %v785 = vrot.slane %v783, 5
        %v786 = vor.u32 %v782, %v785
        %v787 = vrot.slane %v786, 4
        %v789 = vshll.u32 %v284, 16
        %v791 = vrot.slane %v789, 5
        %v792 = vsel %vm750, %v787, %v791
        %v794 = vshrl.u32 %v285, 16
        %v796 = vrot.slane %v794, 4
        %v797 = vshll.u32 %v285, 16
        %v799 = vrot.slane %v797, 5
        %v800 = vor.u32 %v796, %v799
        %v801 = vrot.slane %v800, 4
        %v803 = vshll.u32 %v286, 16
        %v805 = vrot.slane %v803, 5
        %v806 = vsel %vm750, %v801, %v805
        %v808 = vshrl.u32 %v287, 16
        %v810 = vrot.slane %v808, 4
        %v811 = vshll.u32 %v287, 16
        %v813 = vrot.slane %v811, 5
        %v814 = vor.u32 %v810, %v813
        %v815 = vrot.slane %v814, 4
        %v817 = vshll.u32 %v288, 16
        %v819 = vrot.slane %v817, 5
        %v820 = vsel %vm750, %v815, %v819
        %v822 = vshrl.u32 %v289, 16
        %v824 = vrot.slane %v822, 4
        %v825 = vshll.u32 %v289, 16
        %v827 = vrot.slane %v825, 5
        %v828 = vor.u32 %v824, %v827
        %v829 = vrot.slane %v828, 4
        %v831 = vshll.u32 %v290, 16
        %v833 = vrot.slane %v831, 5
        %v834 = vsel %vm750, %v829, %v833
        %v836 = vshrl.u32 %v291, 16
        %v838 = vrot.slane %v836, 4
        %v839 = vshll.u32 %v291, 16
        %v841 = vrot.slane %v839, 5
        %v842 = vor.u32 %v838, %v841
        %v843 = vrot.slane %v842, 4
        %v845 = vshll.u32 %v292, 16
        %v847 = vrot.slane %v845, 5
        %v848 = vsel %vm750, %v843, %v847
        %v850 = vshrl.u32 %v293, 16
        %v852 = vrot.slane %v850, 4
        %v853 = vshll.u32 %v293, 16
        %v855 = vrot.slane %v853, 5
        %v856 = vor.u32 %v852, %v855
        %v857 = vrot.slane %v856, 4
        %v859 = vshll.u32 %v294, 16
        %v861 = vrot.slane %v859, 5
        %v862 = vsel %vm750, %v857, %v861
        %v863 = vunpack.c.l.b16 %v764
        %v864 = vunpack.c.l.b16 %v778
        %v865 = vunpack.c.l.b16 %v792
        %v866 = vunpack.c.l.b16 %v806
        %v867 = vunpack.c.l.b16 %v820
        %v868 = vunpack.c.l.b16 %v834
        %v869 = vunpack.c.l.b16 %v848
        %v870 = vunpack.c.l.b16 %v862
        %v871 = vpack.c.b16 %v864, %v863
        %v872 = vpack.c.b16 %v866, %v865
        %v873 = vpack.c.b16 %v868, %v867
        %v874 = vpack.c.b16 %v870, %v869
        %v895 = vunpack.c.l.b16 %v362
        %v896 = vunpack.c.l.b16 %v363
        %v897 = vunpack.c.l.b16 %v364
        %v898 = vunpack.c.l.b16 %v365
        %v899 = vunpack.c.l.b16 %v366
        %v900 = vunpack.c.l.b16 %v367
        %v901 = vunpack.c.l.b16 %v368
        %v902 = vunpack.c.l.b16 %v369
        %v903 = vunpack.c.l.b16 %v370
        %v904 = vunpack.c.l.b16 %v371
        %v905 = vunpack.c.l.b16 %v372
        %v906 = vunpack.c.l.b16 %v373
        %v907 = vunpack.c.l.b16 %v374
        %v908 = vunpack.c.l.b16 %v375
        %v909 = vunpack.c.l.b16 %v376
        %v910 = vunpack.c.l.b16 %v377
        %v911 = vpack.c.b16 %v896, %v895
        %v912 = vpack.c.b16 %v898, %v897
        %v913 = vpack.c.b16 %v900, %v899
        %v914 = vpack.c.b16 %v902, %v901
        %v915 = vpack.c.b16 %v904, %v903
        %v916 = vpack.c.b16 %v906, %v905
        %v917 = vpack.c.b16 %v908, %v907
        %v918 = vpack.c.b16 %v910, %v909
        %927 = vmatprep.subr.bf16.mxu0 0
        %928 = vmatpush1.bf16.msra.mxu0 %v918
        %929 = vmatprep.subr.bf16.mxu0 0
        %930 = vmatpush1.bf16.msra.mxu0 %v917
        %931 = vmatprep.subr.bf16.mxu0 0
        %932 = vmatpush1.bf16.msra.mxu0 %v916
        %933 = vmatprep.subr.bf16.mxu0 0
        %934 = vmatpush1.bf16.msra.mxu0 %v915
        %935 = vmatprep.subr.bf16.mxu0 0
        %936 = vmatpush1.bf16.msra.mxu0 %v914
        %937 = vmatprep.subr.bf16.mxu0 0
        %938 = vmatpush1.bf16.msra.mxu0 %v913
        %939 = vmatprep.subr.bf16.mxu0 0
        %940 = vmatpush1.bf16.msra.mxu0 %v912
        %941 = vmatprep.subr.bf16.mxu0 0
        %942 = vmatpush1.bf16.msra.mxu0 %v911
        %943 = vmatprep.subr.bf16.mxu0 0
        %944 = vmatpush2.bf16.msra.mxu0 0
        %945 = vmatprep.subr.bf16.mxu0 0
        %946 = vmatpush2.bf16.msra.mxu0 0
        %947 = vmatprep.subr.bf16.mxu0 0
        %948 = vmatpush2.bf16.msra.mxu0 0
        %949 = vmatprep.subr.bf16.mxu0 0
        %950 = vmatpush2.bf16.msra.mxu0 0
        %951 = vmatprep.subr.bf16.mxu0 0
        %952 = vmatpush2.bf16.msra.mxu0 0
        %953 = vmatprep.subr.bf16.mxu0 0
        %954 = vmatpush2.bf16.msra.mxu0 0
        %955 = vmatprep.subr.bf16.mxu0 0
        %956 = vmatpush2.bf16.msra.mxu0 0
        %957 = vmatprep.subr.bf16.mxu0 0
        %958 = vmatpush2.bf16.msra.mxu0 0
        %959 = vmatprep.mubr.bf16.mxu0 0
        %960 = vmatmul.mubr.bf16.gmra.mxu0 %v871
        %v961 = vpop.f32.mrf.mxu0
        %v962 = vadd.f32 0.0, %v961
        %v963 = vpop.f32.mrf.mxu0
        %v964 = vpop.f32.mrf.mxu0
        %v965 = vadd.f32 0.0, %v964
        %v966 = vpop.f32.mrf.mxu0
        %967 = vmatprep.mubr.bf16.mxu0 0
        %968 = vmatmul.mubr.bf16.gmra.mxu0 %v872
        %v969 = vpop.f32.mrf.mxu0
        %v970 = vadd.f32 0.0, %v969
        %v971 = vpop.f32.mrf.mxu0
        %v972 = vpop.f32.mrf.mxu0
        %v973 = vadd.f32 0.0, %v972
        %v974 = vpop.f32.mrf.mxu0
        %975 = vmatprep.mubr.bf16.mxu0 0
        %976 = vmatmul.mubr.bf16.gmra.mxu0 %v873
        %v977 = vpop.f32.mrf.mxu0
        %v978 = vadd.f32 0.0, %v977
        %v979 = vpop.f32.mrf.mxu0
        %v980 = vpop.f32.mrf.mxu0
        %v981 = vadd.f32 0.0, %v980
        %v982 = vpop.f32.mrf.mxu0
        %983 = vmatprep.mubr.bf16.mxu0 0
        %984 = vmatmul.mubr.bf16.gmra.mxu0 %v874
        %v985 = vpop.f32.mrf.mxu0
        %v986 = vadd.f32 0.0, %v985
        %v987 = vpop.f32.mrf.mxu0
        %v988 = vpop.f32.mrf.mxu0
        %v989 = vadd.f32 0.0, %v988
        %v990 = vpop.f32.mrf.mxu0
        %991 = vdwg.mxu0
        %v992 = vadd.f32 %v718, %v962
        %v993 = vadd.f32 %v721, %v965
        %v994 = vadd.f32 %v726, %v970
        %v995 = vadd.f32 %v729, %v973
        %v996 = vadd.f32 %v734, %v978
        %v997 = vadd.f32 %v737, %v981
        %v998 = vadd.f32 %v742, %v986
        %v999 = vadd.f32 %v745, %v989
        %v1008 = vunpack.c.l.b16 %v306
        %v1009 = vunpack.c.l.b16 %v308
        %v1010 = vunpack.c.l.b16 %v310
        %v1011 = vunpack.c.l.b16 %v312
        %v1012 = vunpack.c.l.b16 %v314
        %v1013 = vunpack.c.l.b16 %v316
        %v1014 = vunpack.c.l.b16 %v318
        %v1015 = vunpack.c.l.b16 %v320
        %v1016 = vpack.c.b16 %v1009, %v1008
        %v1017 = vpack.c.b16 %v1011, %v1010
        %v1018 = vpack.c.b16 %v1013, %v1012
        %v1019 = vpack.c.b16 %v1015, %v1014
        %v1040 = vunpack.c.l.b16 %v378
        %v1041 = vunpack.c.l.b16 %v379
        %v1042 = vunpack.c.l.b16 %v380
        %v1043 = vunpack.c.l.b16 %v381
        %v1044 = vunpack.c.l.b16 %v382
        %v1045 = vunpack.c.l.b16 %v383
        %v1046 = vunpack.c.l.b16 %v384
        %v1047 = vunpack.c.l.b16 %v385
        %v1048 = vunpack.c.l.b16 %v386
        %v1049 = vunpack.c.l.b16 %v387
        %v1050 = vunpack.c.l.b16 %v388
        %v1051 = vunpack.c.l.b16 %v389
        %v1052 = vunpack.c.l.b16 %v390
        %v1053 = vunpack.c.l.b16 %v391
        %v1054 = vunpack.c.l.b16 %v392
        %v1055 = vunpack.c.l.b16 %v393
        %v1056 = vpack.c.b16 %v1041, %v1040
        %v1057 = vpack.c.b16 %v1043, %v1042
        %v1058 = vpack.c.b16 %v1045, %v1044
        %v1059 = vpack.c.b16 %v1047, %v1046
        %v1060 = vpack.c.b16 %v1049, %v1048
        %v1061 = vpack.c.b16 %v1051, %v1050
        %v1062 = vpack.c.b16 %v1053, %v1052
        %v1063 = vpack.c.b16 %v1055, %v1054
        %1072 = vmatprep.subr.bf16.mxu0 0
        %1073 = vmatpush1.bf16.msra.mxu0 %v1063
        %1074 = vmatprep.subr.bf16.mxu0 0
        %1075 = vmatpush1.bf16.msra.mxu0 %v1062
        %1076 = vmatprep.subr.bf16.mxu0 0
        %1077 = vmatpush1.bf16.msra.mxu0 %v1061
        %1078 = vmatprep.subr.bf16.mxu0 0
        %1079 = vmatpush1.bf16.msra.mxu0 %v1060
        %1080 = vmatprep.subr.bf16.mxu0 0
        %1081 = vmatpush1.bf16.msra.mxu0 %v1059
        %1082 = vmatprep.subr.bf16.mxu0 0
        %1083 = vmatpush1.bf16.msra.mxu0 %v1058
        %1084 = vmatprep.subr.bf16.mxu0 0
        %1085 = vmatpush1.bf16.msra.mxu0 %v1057
        %1086 = vmatprep.subr.bf16.mxu0 0
        %1087 = vmatpush1.bf16.msra.mxu0 %v1056
        %1088 = vmatprep.subr.bf16.mxu0 0
        %1089 = vmatpush2.bf16.msra.mxu0 0
        %1090 = vmatprep.subr.bf16.mxu0 0
        %1091 = vmatpush2.bf16.msra.mxu0 0
        %1092 = vmatprep.subr.bf16.mxu0 0
        %1093 = vmatpush2.bf16.msra.mxu0 0
        %1094 = vmatprep.subr.bf16.mxu0 0
        %1095 = vmatpush2.bf16.msra.mxu0 0
        %1096 = vmatprep.subr.bf16.mxu0 0
        %1097 = vmatpush2.bf16.msra.mxu0 0
        %1098 = vmatprep.subr.bf16.mxu0 0
        %1099 = vmatpush2.bf16.msra.mxu0 0
        %1100 = vmatprep.subr.bf16.mxu0 0
        %1101 = vmatpush2.bf16.msra.mxu0 0
        %1102 = vmatprep.subr.bf16.mxu0 0
        %1103 = vmatpush2.bf16.msra.mxu0 0
        %1104 = vmatprep.mubr.bf16.mxu0 0
        %1105 = vmatmul.mubr.bf16.gmra.mxu0 %v1016
        %v1106 = vpop.f32.mrf.mxu0
        %v1107 = vadd.f32 0.0, %v1106
        %v1108 = vpop.f32.mrf.mxu0
        %v1109 = vpop.f32.mrf.mxu0
        %v1110 = vadd.f32 0.0, %v1109
        %v1111 = vpop.f32.mrf.mxu0
        %1112 = vmatprep.mubr.bf16.mxu0 0
        %1113 = vmatmul.mubr.bf16.gmra.mxu0 %v1017
        %v1114 = vpop.f32.mrf.mxu0
        %v1115 = vadd.f32 0.0, %v1114
        %v1116 = vpop.f32.mrf.mxu0
        %v1117 = vpop.f32.mrf.mxu0
        %v1118 = vadd.f32 0.0, %v1117
        %v1119 = vpop.f32.mrf.mxu0
        %1120 = vmatprep.mubr.bf16.mxu0 0
        %1121 = vmatmul.mubr.bf16.gmra.mxu0 %v1018
        %v1122 = vpop.f32.mrf.mxu0
        %v1123 = vadd.f32 0.0, %v1122
        %v1124 = vpop.f32.mrf.mxu0
        %v1125 = vpop.f32.mrf.mxu0
        %v1126 = vadd.f32 0.0, %v1125
        %v1127 = vpop.f32.mrf.mxu0
        %1128 = vmatprep.mubr.bf16.mxu0 0
        %1129 = vmatmul.mubr.bf16.gmra.mxu0 %v1019
        %v1130 = vpop.f32.mrf.mxu0
        %v1131 = vadd.f32 0.0, %v1130
        %v1132 = vpop.f32.mrf.mxu0
        %v1133 = vpop.f32.mrf.mxu0
        %v1134 = vadd.f32 0.0, %v1133
        %v1135 = vpop.f32.mrf.mxu0
        %1136 = vdwg.mxu0
        %v1137 = vadd.f32 %v992, %v1107
        %v1138 = vadd.f32 %v993, %v1110
        %v1139 = vadd.f32 %v994, %v1115
        %v1140 = vadd.f32 %v995, %v1118
        %v1141 = vadd.f32 %v996, %v1123
        %v1142 = vadd.f32 %v997, %v1126
        %v1143 = vadd.f32 %v998, %v1131
        %v1144 = vadd.f32 %v999, %v1134
        %v1153 = vunpack.c.l.b16 %v322
        %v1154 = vunpack.c.l.b16 %v323
        %v1155 = vunpack.c.l.b16 %v324
        %v1156 = vunpack.c.l.b16 %v325
        %v1157 = vunpack.c.l.b16 %v326
        %v1158 = vunpack.c.l.b16 %v327
        %v1159 = vunpack.c.l.b16 %v328
        %v1160 = vunpack.c.l.b16 %v329
        %v1161 = vpack.c.b16 %v1154, %v1153
        %v1162 = vpack.c.b16 %v1156, %v1155
        %v1163 = vpack.c.b16 %v1158, %v1157
        %v1164 = vpack.c.b16 %v1160, %v1159
        %v1185 = vunpack.c.l.b16 %v394
        %v1186 = vunpack.c.l.b16 %v395
        %v1187 = vunpack.c.l.b16 %v396
        %v1188 = vunpack.c.l.b16 %v397
        %v1189 = vunpack.c.l.b16 %v398
        %v1190 = vunpack.c.l.b16 %v399
        %v1191 = vunpack.c.l.b16 %v400
        %v1192 = vunpack.c.l.b16 %v401
        %v1193 = vunpack.c.l.b16 %v402
        %v1194 = vunpack.c.l.b16 %v403
        %v1195 = vunpack.c.l.b16 %v404
        %v1196 = vunpack.c.l.b16 %v405
        %v1197 = vunpack.c.l.b16 %v406
        %v1198 = vunpack.c.l.b16 %v407
        %v1199 = vunpack.c.l.b16 %v408
        %v1200 = vunpack.c.l.b16 %v409
        %v1201 = vpack.c.b16 %v1186, %v1185
        %v1202 = vpack.c.b16 %v1188, %v1187
        %v1203 = vpack.c.b16 %v1190, %v1189
        %v1204 = vpack.c.b16 %v1192, %v1191
        %v1205 = vpack.c.b16 %v1194, %v1193
        %v1206 = vpack.c.b16 %v1196, %v1195
        %v1207 = vpack.c.b16 %v1198, %v1197
        %v1208 = vpack.c.b16 %v1200, %v1199
        %1217 = vmatprep.subr.bf16.mxu0 0
        %1218 = vmatpush1.bf16.msra.mxu0 %v1208
        %1219 = vmatprep.subr.bf16.mxu0 0
        %1220 = vmatpush1.bf16.msra.mxu0 %v1207
        %1221 = vmatprep.subr.bf16.mxu0 0
        %1222 = vmatpush1.bf16.msra.mxu0 %v1206
        %1223 = vmatprep.subr.bf16.mxu0 0
        %1224 = vmatpush1.bf16.msra.mxu0 %v1205
        %1225 = vmatprep.subr.bf16.mxu0 0
        %1226 = vmatpush1.bf16.msra.mxu0 %v1204
        %1227 = vmatprep.subr.bf16.mxu0 0
        %1228 = vmatpush1.bf16.msra.mxu0 %v1203
        %1229 = vmatprep.subr.bf16.mxu0 0
        %1230 = vmatpush1.bf16.msra.mxu0 %v1202
        %1231 = vmatprep.subr.bf16.mxu0 0
        %1232 = vmatpush1.bf16.msra.mxu0 %v1201
        %1233 = vmatprep.subr.bf16.mxu0 0
        %1234 = vmatpush2.bf16.msra.mxu0 0
        %1235 = vmatprep.subr.bf16.mxu0 0
        %1236 = vmatpush2.bf16.msra.mxu0 0
        %1237 = vmatprep.subr.bf16.mxu0 0
        %1238 = vmatpush2.bf16.msra.mxu0 0
        %1239 = vmatprep.subr.bf16.mxu0 0
        %1240 = vmatpush2.bf16.msra.mxu0 0
        %1241 = vmatprep.subr.bf16.mxu0 0
        %1242 = vmatpush2.bf16.msra.mxu0 0
        %1243 = vmatprep.subr.bf16.mxu0 0
        %1244 = vmatpush2.bf16.msra.mxu0 0
        %1245 = vmatprep.subr.bf16.mxu0 0
        %1246 = vmatpush2.bf16.msra.mxu0 0
        %1247 = vmatprep.subr.bf16.mxu0 0
        %1248 = vmatpush2.bf16.msra.mxu0 0
        %1249 = vmatprep.mubr.bf16.mxu0 0
        %1250 = vmatmul.mubr.bf16.gmra.mxu0 %v1161
        %v1251 = vpop.f32.mrf.mxu0
        %v1252 = vadd.f32 0.0, %v1251
        %v1253 = vpop.f32.mrf.mxu0
        %v1254 = vpop.f32.mrf.mxu0
        %v1255 = vadd.f32 0.0, %v1254
        %v1256 = vpop.f32.mrf.mxu0
        %1257 = vmatprep.mubr.bf16.mxu0 0
        %1258 = vmatmul.mubr.bf16.gmra.mxu0 %v1162
        %v1259 = vpop.f32.mrf.mxu0
        %v1260 = vadd.f32 0.0, %v1259
        %v1261 = vpop.f32.mrf.mxu0
        %v1262 = vpop.f32.mrf.mxu0
        %v1263 = vadd.f32 0.0, %v1262
        %v1264 = vpop.f32.mrf.mxu0
        %1265 = vmatprep.mubr.bf16.mxu0 0
        %1266 = vmatmul.mubr.bf16.gmra.mxu0 %v1163
        %v1267 = vpop.f32.mrf.mxu0
        %v1268 = vadd.f32 0.0, %v1267
        %v1269 = vpop.f32.mrf.mxu0
        %v1270 = vpop.f32.mrf.mxu0
        %v1271 = vadd.f32 0.0, %v1270
        %v1272 = vpop.f32.mrf.mxu0
        %1273 = vmatprep.mubr.bf16.mxu0 0
        %1274 = vmatmul.mubr.bf16.gmra.mxu0 %v1164
        %v1275 = vpop.f32.mrf.mxu0
        %v1276 = vadd.f32 0.0, %v1275
        %v1277 = vpop.f32.mrf.mxu0
        %v1278 = vpop.f32.mrf.mxu0
        %v1279 = vadd.f32 0.0, %v1278
        %v1280 = vpop.f32.mrf.mxu0
        %1281 = vdwg.mxu0
        %v1282 = vadd.f32 %v1137, %v1252
        %v1283 = vadd.f32 %v1138, %v1255
        %v1284 = vadd.f32 %v1139, %v1260
        %v1285 = vadd.f32 %v1140, %v1263
        %v1286 = vadd.f32 %v1141, %v1268
        %v1287 = vadd.f32 %v1142, %v1271
        %v1288 = vadd.f32 %v1143, %v1276
        %v1289 = vadd.f32 %v1144, %v1279
        %v1291 = vshrl.u32 %v306, 16
        %v1293 = vrot.slane %v1291, 4
        %v1294 = vshll.u32 %v306, 16
        %v1296 = vrot.slane %v1294, 5
        %v1297 = vor.u32 %v1293, %v1296
        %v1298 = vrot.slane %v1297, 4
        %v1300 = vshll.u32 %v307, 16
        %v1302 = vrot.slane %v1300, 5
        %v1303 = vsel %vm750, %v1298, %v1302
        %v1305 = vshrl.u32 %v308, 16
        %v1307 = vrot.slane %v1305, 4
        %v1308 = vshll.u32 %v308, 16
        %v1310 = vrot.slane %v1308, 5
        %v1311 = vor.u32 %v1307, %v1310
        %v1312 = vrot.slane %v1311, 4
        %v1314 = vshll.u32 %v309, 16
        %v1316 = vrot.slane %v1314, 5
        %v1317 = vsel %vm750, %v1312, %v1316
        %v1319 = vshrl.u32 %v310, 16
        %v1321 = vrot.slane %v1319, 4
        %v1322 = vshll.u32 %v310, 16
        %v1324 = vrot.slane %v1322, 5
        %v1325 = vor.u32 %v1321, %v1324
        %v1326 = vrot.slane %v1325, 4
        %v1328 = vshll.u32 %v311, 16
        %v1330 = vrot.slane %v1328, 5
        %v1331 = vsel %vm750, %v1326, %v1330
        %v1333 = vshrl.u32 %v312, 16
        %v1335 = vrot.slane %v1333, 4
        %v1336 = vshll.u32 %v312, 16
        %v1338 = vrot.slane %v1336, 5
        %v1339 = vor.u32 %v1335, %v1338
        %v1340 = vrot.slane %v1339, 4
        %v1342 = vshll.u32 %v313, 16
        %v1344 = vrot.slane %v1342, 5
        %v1345 = vsel %vm750, %v1340, %v1344
        %v1347 = vshrl.u32 %v314, 16
        %v1349 = vrot.slane %v1347, 4
        %v1350 = vshll.u32 %v314, 16
        %v1352 = vrot.slane %v1350, 5
        %v1353 = vor.u32 %v1349, %v1352
        %v1354 = vrot.slane %v1353, 4
        %v1356 = vshll.u32 %v315, 16
        %v1358 = vrot.slane %v1356, 5
        %v1359 = vsel %vm750, %v1354, %v1358
        %v1361 = vshrl.u32 %v316, 16
        %v1363 = vrot.slane %v1361, 4
        %v1364 = vshll.u32 %v316, 16
        %v1366 = vrot.slane %v1364, 5
        %v1367 = vor.u32 %v1363, %v1366
        %v1368 = vrot.slane %v1367, 4
        %v1370 = vshll.u32 %v317, 16
        %v1372 = vrot.slane %v1370, 5
        %v1373 = vsel %vm750, %v1368, %v1372
        %v1375 = vshrl.u32 %v318, 16
        %v1377 = vrot.slane %v1375, 4
        %v1378 = vshll.u32 %v318, 16
        %v1380 = vrot.slane %v1378, 5
        %v1381 = vor.u32 %v1377, %v1380
        %v1382 = vrot.slane %v1381, 4
        %v1384 = vshll.u32 %v319, 16
        %v1386 = vrot.slane %v1384, 5
        %v1387 = vsel %vm750, %v1382, %v1386
        %v1389 = vshrl.u32 %v320, 16
        %v1391 = vrot.slane %v1389, 4
        %v1392 = vshll.u32 %v320, 16
        %v1394 = vrot.slane %v1392, 5
        %v1395 = vor.u32 %v1391, %v1394
        %v1396 = vrot.slane %v1395, 4
        %v1398 = vshll.u32 %v321, 16
        %v1400 = vrot.slane %v1398, 5
        %v1401 = vsel %vm750, %v1396, %v1400
        %v1402 = vunpack.c.l.b16 %v1303
        %v1403 = vunpack.c.l.b16 %v1317
        %v1404 = vunpack.c.l.b16 %v1331
        %v1405 = vunpack.c.l.b16 %v1345
        %v1406 = vunpack.c.l.b16 %v1359
        %v1407 = vunpack.c.l.b16 %v1373
        %v1408 = vunpack.c.l.b16 %v1387
        %v1409 = vunpack.c.l.b16 %v1401
        %v1410 = vpack.c.b16 %v1403, %v1402
        %v1411 = vpack.c.b16 %v1405, %v1404
        %v1412 = vpack.c.b16 %v1407, %v1406
        %v1413 = vpack.c.b16 %v1409, %v1408
        %v1434 = vunpack.c.l.b16 %v410
        %v1435 = vunpack.c.l.b16 %v411
        %v1436 = vunpack.c.l.b16 %v412
        %v1437 = vunpack.c.l.b16 %v413
        %v1438 = vunpack.c.l.b16 %v414
        %v1439 = vunpack.c.l.b16 %v415
        %v1440 = vunpack.c.l.b16 %v416
        %v1441 = vunpack.c.l.b16 %v417
        %v1442 = vunpack.c.l.b16 %v418
        %v1443 = vunpack.c.l.b16 %v419
        %v1444 = vunpack.c.l.b16 %v420
        %v1445 = vunpack.c.l.b16 %v421
        %v1446 = vunpack.c.l.b16 %v422
        %v1447 = vunpack.c.l.b16 %v423
        %v1448 = vunpack.c.l.b16 %v424
        %v1449 = vunpack.c.l.b16 %v425
        %v1450 = vpack.c.b16 %v1435, %v1434
        %v1451 = vpack.c.b16 %v1437, %v1436
        %v1452 = vpack.c.b16 %v1439, %v1438
        %v1453 = vpack.c.b16 %v1441, %v1440
        %v1454 = vpack.c.b16 %v1443, %v1442
        %v1455 = vpack.c.b16 %v1445, %v1444
        %v1456 = vpack.c.b16 %v1447, %v1446
        %v1457 = vpack.c.b16 %v1449, %v1448
        %1466 = vmatprep.subr.bf16.mxu0 0
        %1467 = vmatpush1.bf16.msra.mxu0 %v1457
        %1468 = vmatprep.subr.bf16.mxu0 0
        %1469 = vmatpush1.bf16.msra.mxu0 %v1456
        %1470 = vmatprep.subr.bf16.mxu0 0
        %1471 = vmatpush1.bf16.msra.mxu0 %v1455
        %1472 = vmatprep.subr.bf16.mxu0 0
        %1473 = vmatpush1.bf16.msra.mxu0 %v1454
        %1474 = vmatprep.subr.bf16.mxu0 0
        %1475 = vmatpush1.bf16.msra.mxu0 %v1453
        %1476 = vmatprep.subr.bf16.mxu0 0
        %1477 = vmatpush1.bf16.msra.mxu0 %v1452
        %1478 = vmatprep.subr.bf16.mxu0 0
        %1479 = vmatpush1.bf16.msra.mxu0 %v1451
        %1480 = vmatprep.subr.bf16.mxu0 0
        %1481 = vmatpush1.bf16.msra.mxu0 %v1450
        %1482 = vmatprep.subr.bf16.mxu0 0
        %1483 = vmatpush2.bf16.msra.mxu0 0
        %1484 = vmatprep.subr.bf16.mxu0 0
        %1485 = vmatpush2.bf16.msra.mxu0 0
        %1486 = vmatprep.subr.bf16.mxu0 0
        %1487 = vmatpush2.bf16.msra.mxu0 0
        %1488 = vmatprep.subr.bf16.mxu0 0
        %1489 = vmatpush2.bf16.msra.mxu0 0
        %1490 = vmatprep.subr.bf16.mxu0 0
        %1491 = vmatpush2.bf16.msra.mxu0 0
        %1492 = vmatprep.subr.bf16.mxu0 0
        %1493 = vmatpush2.bf16.msra.mxu0 0
        %1494 = vmatprep.subr.bf16.mxu0 0
        %1495 = vmatpush2.bf16.msra.mxu0 0
        %1496 = vmatprep.subr.bf16.mxu0 0
        %1497 = vmatpush2.bf16.msra.mxu0 0
        %1498 = vmatprep.mubr.bf16.mxu0 0
        %1499 = vmatmul.mubr.bf16.gmra.mxu0 %v1410
        %v1500 = vpop.f32.mrf.mxu0
        %v1501 = vadd.f32 0.0, %v1500
        %v1502 = vpop.f32.mrf.mxu0
        %v1503 = vpop.f32.mrf.mxu0
        %v1504 = vadd.f32 0.0, %v1503
        %v1505 = vpop.f32.mrf.mxu0
        %1506 = vmatprep.mubr.bf16.mxu0 0
        %1507 = vmatmul.mubr.bf16.gmra.mxu0 %v1411
        %v1508 = vpop.f32.mrf.mxu0
        %v1509 = vadd.f32 0.0, %v1508
        %v1510 = vpop.f32.mrf.mxu0
        %v1511 = vpop.f32.mrf.mxu0
        %v1512 = vadd.f32 0.0, %v1511
        %v1513 = vpop.f32.mrf.mxu0
        %1514 = vmatprep.mubr.bf16.mxu0 0
        %1515 = vmatmul.mubr.bf16.gmra.mxu0 %v1412
        %v1516 = vpop.f32.mrf.mxu0
        %v1517 = vadd.f32 0.0, %v1516
        %v1518 = vpop.f32.mrf.mxu0
        %v1519 = vpop.f32.mrf.mxu0
        %v1520 = vadd.f32 0.0, %v1519
        %v1521 = vpop.f32.mrf.mxu0
        %1522 = vmatprep.mubr.bf16.mxu0 0
        %1523 = vmatmul.mubr.bf16.gmra.mxu0 %v1413
        %v1524 = vpop.f32.mrf.mxu0
        %v1525 = vadd.f32 0.0, %v1524
        %v1526 = vpop.f32.mrf.mxu0
        %v1527 = vpop.f32.mrf.mxu0
        %v1528 = vadd.f32 0.0, %v1527
        %v1529 = vpop.f32.mrf.mxu0
        %1530 = vdwg.mxu0
        %v1531 = vadd.f32 %v1282, %v1501
        %v1532 = vadd.f32 %v1283, %v1504
        %v1533 = vadd.f32 %v1284, %v1509
        %v1534 = vadd.f32 %v1285, %v1512
        %v1535 = vadd.f32 %v1286, %v1517
        %v1536 = vadd.f32 %v1287, %v1520
        %v1537 = vadd.f32 %v1288, %v1525
        %v1538 = vadd.f32 %v1289, %v1528
        %v1540 = vunpack.c.l.b16 %v295
        %v1541 = vpack.c.b16 %v621, %v620
        %v1542 = vpack.c.b16 %v623, %v622
        %v1543 = vpack.c.b16 %v625, %v624
        %v1544 = vpack.c.b16 %v1540, %v626
        %v1565 = vunpack.c.l.b16 %v426
        %v1566 = vunpack.c.l.b16 %v427
        %v1567 = vunpack.c.l.b16 %v428
        %v1568 = vunpack.c.l.b16 %v429
        %v1569 = vunpack.c.l.b16 %v430
        %v1570 = vunpack.c.l.b16 %v431
        %v1571 = vunpack.c.l.b16 %v432
        %v1572 = vunpack.c.l.b16 %v433
        %v1573 = vunpack.c.l.b16 %v434
        %v1574 = vunpack.c.l.b16 %v435
        %v1575 = vunpack.c.l.b16 %v436
        %v1576 = vunpack.c.l.b16 %v437
        %v1577 = vunpack.c.l.b16 %v438
        %v1578 = vunpack.c.l.b16 %v439
        %v1579 = vunpack.c.l.b16 %v440
        %v1580 = vunpack.c.l.b16 %v441
        %v1581 = vpack.c.b16 %v1566, %v1565
        %v1582 = vpack.c.b16 %v1568, %v1567
        %v1583 = vpack.c.b16 %v1570, %v1569
        %v1584 = vpack.c.b16 %v1572, %v1571
        %v1585 = vpack.c.b16 %v1574, %v1573
        %v1586 = vpack.c.b16 %v1576, %v1575
        %v1587 = vpack.c.b16 %v1578, %v1577
        %v1588 = vpack.c.b16 %v1580, %v1579
        %1597 = vmatprep.subr.bf16.mxu0 0
        %1598 = vmatpush1.bf16.msra.mxu0 %v1588
        %1599 = vmatprep.subr.bf16.mxu0 0
        %1600 = vmatpush1.bf16.msra.mxu0 %v1587
        %1601 = vmatprep.subr.bf16.mxu0 0
        %1602 = vmatpush1.bf16.msra.mxu0 %v1586
        %1603 = vmatprep.subr.bf16.mxu0 0
        %1604 = vmatpush1.bf16.msra.mxu0 %v1585
        %1605 = vmatprep.subr.bf16.mxu0 0
        %1606 = vmatpush1.bf16.msra.mxu0 %v1584
        %1607 = vmatprep.subr.bf16.mxu0 0
        %1608 = vmatpush1.bf16.msra.mxu0 %v1583
        %1609 = vmatprep.subr.bf16.mxu0 0
        %1610 = vmatpush1.bf16.msra.mxu0 %v1582
        %1611 = vmatprep.subr.bf16.mxu0 0
        %1612 = vmatpush1.bf16.msra.mxu0 %v1581
        %1613 = vmatprep.subr.bf16.mxu0 0
        %1614 = vmatpush2.bf16.msra.mxu0 0
        %1615 = vmatprep.subr.bf16.mxu0 0
        %1616 = vmatpush2.bf16.msra.mxu0 0
        %1617 = vmatprep.subr.bf16.mxu0 0
        %1618 = vmatpush2.bf16.msra.mxu0 0
        %1619 = vmatprep.subr.bf16.mxu0 0
        %1620 = vmatpush2.bf16.msra.mxu0 0
        %1621 = vmatprep.subr.bf16.mxu0 0
        %1622 = vmatpush2.bf16.msra.mxu0 0
        %1623 = vmatprep.subr.bf16.mxu0 0
        %1624 = vmatpush2.bf16.msra.mxu0 0
        %1625 = vmatprep.subr.bf16.mxu0 0
        %1626 = vmatpush2.bf16.msra.mxu0 0
        %1627 = vmatprep.subr.bf16.mxu0 0
        %1628 = vmatpush2.bf16.msra.mxu0 0
        %1629 = vmatprep.mubr.bf16.mxu0 0
        %1630 = vmatmul.mubr.bf16.gmra.mxu0 %v1541
        %v1631 = vpop.f32.mrf.mxu0
        %v1632 = vadd.f32 0.0, %v1631
        %v1633 = vpop.f32.mrf.mxu0
        %v1634 = vpop.f32.mrf.mxu0
        %v1635 = vadd.f32 0.0, %v1634
        %v1636 = vpop.f32.mrf.mxu0
        %1637 = vmatprep.mubr.bf16.mxu0 0
        %1638 = vmatmul.mubr.bf16.gmra.mxu0 %v1542
        %v1639 = vpop.f32.mrf.mxu0
        %v1640 = vadd.f32 0.0, %v1639
        %v1641 = vpop.f32.mrf.mxu0
        %v1642 = vpop.f32.mrf.mxu0
        %v1643 = vadd.f32 0.0, %v1642
        %v1644 = vpop.f32.mrf.mxu0
        %1645 = vmatprep.mubr.bf16.mxu0 0
        %1646 = vmatmul.mubr.bf16.gmra.mxu0 %v1543
        %v1647 = vpop.f32.mrf.mxu0
        %v1648 = vadd.f32 0.0, %v1647
        %v1649 = vpop.f32.mrf.mxu0
        %v1650 = vpop.f32.mrf.mxu0
        %v1651 = vadd.f32 0.0, %v1650
        %v1652 = vpop.f32.mrf.mxu0
        %1653 = vmatprep.mubr.bf16.mxu0 0
        %1654 = vmatmul.mubr.bf16.gmra.mxu0 %v1544
        %v1655 = vpop.f32.mrf.mxu0
        %v1656 = vadd.f32 0.0, %v1655
        %v1657 = vpop.f32.mrf.mxu0
        %v1658 = vpop.f32.mrf.mxu0
        %v1659 = vadd.f32 0.0, %v1658
        %v1660 = vpop.f32.mrf.mxu0
        %1661 = vdwg.mxu0
        %v1662 = vadd.f32 %v1531, %v1632
        %v1663 = vadd.f32 %v1532, %v1635
        %v1664 = vadd.f32 %v1533, %v1640
        %v1665 = vadd.f32 %v1534, %v1643
        %v1666 = vadd.f32 %v1535, %v1648
        %v1667 = vadd.f32 %v1536, %v1651
        %v1668 = vadd.f32 %v1537, %v1656
        %v1669 = vadd.f32 %v1538, %v1659
        %v1671 = vunpack.c.l.b16 %v305
        %v1672 = vpack.c.b16 %v484, %v483
        %v1673 = vpack.c.b16 %v486, %v485
        %v1674 = vpack.c.b16 %v488, %v487
        %v1675 = vpack.c.b16 %v1671, %v489
        %v1696 = vunpack.c.l.b16 %v442
        %v1697 = vunpack.c.l.b16 %v443
        %v1698 = vunpack.c.l.b16 %v444
        %v1699 = vunpack.c.l.b16 %v445
        %v1700 = vunpack.c.l.b16 %v446
        %v1701 = vunpack.c.l.b16 %v447
        %v1702 = vunpack.c.l.b16 %v448
        %v1703 = vunpack.c.l.b16 %v449
        %v1704 = vunpack.c.l.b16 %v450
        %v1705 = vunpack.c.l.b16 %v451
        %v1706 = vunpack.c.l.b16 %v452
        %v1707 = vunpack.c.l.b16 %v453
        %v1708 = vunpack.c.l.b16 %v454
        %v1709 = vunpack.c.l.b16 %v455
        %v1710 = vunpack.c.l.b16 %v456
        %v1711 = vunpack.c.l.b16 %v457
        %v1712 = vpack.c.b16 %v1697, %v1696
        %v1713 = vpack.c.b16 %v1699, %v1698
        %v1714 = vpack.c.b16 %v1701, %v1700
        %v1715 = vpack.c.b16 %v1703, %v1702
        %v1716 = vpack.c.b16 %v1705, %v1704
        %v1717 = vpack.c.b16 %v1707, %v1706
        %v1718 = vpack.c.b16 %v1709, %v1708
        %v1719 = vpack.c.b16 %v1711, %v1710
        %1728 = vmatprep.subr.bf16.mxu0 0
        %1729 = vmatpush1.bf16.msra.mxu0 %v1719
        %1730 = vmatprep.subr.bf16.mxu0 0
        %1731 = vmatpush1.bf16.msra.mxu0 %v1718
        %1732 = vmatprep.subr.bf16.mxu0 0
        %1733 = vmatpush1.bf16.msra.mxu0 %v1717
        %1734 = vmatprep.subr.bf16.mxu0 0
        %1735 = vmatpush1.bf16.msra.mxu0 %v1716
        %1736 = vmatprep.subr.bf16.mxu0 0
        %1737 = vmatpush1.bf16.msra.mxu0 %v1715
        %1738 = vmatprep.subr.bf16.mxu0 0
        %1739 = vmatpush1.bf16.msra.mxu0 %v1714
        %1740 = vmatprep.subr.bf16.mxu0 0
        %1741 = vmatpush1.bf16.msra.mxu0 %v1713
        %1742 = vmatprep.subr.bf16.mxu0 0
        %1743 = vmatpush1.bf16.msra.mxu0 %v1712
        %1744 = vmatprep.subr.bf16.mxu0 0
        %1745 = vmatpush2.bf16.msra.mxu0 0
        %1746 = vmatprep.subr.bf16.mxu0 0
        %1747 = vmatpush2.bf16.msra.mxu0 0
        %1748 = vmatprep.subr.bf16.mxu0 0
        %1749 = vmatpush2.bf16.msra.mxu0 0
        %1750 = vmatprep.subr.bf16.mxu0 0
        %1751 = vmatpush2.bf16.msra.mxu0 0
        %1752 = vmatprep.subr.bf16.mxu0 0
        %1753 = vmatpush2.bf16.msra.mxu0 0
        %1754 = vmatprep.subr.bf16.mxu0 0
        %1755 = vmatpush2.bf16.msra.mxu0 0
        %1756 = vmatprep.subr.bf16.mxu0 0
        %1757 = vmatpush2.bf16.msra.mxu0 0
        %1758 = vmatprep.subr.bf16.mxu0 0
        %1759 = vmatpush2.bf16.msra.mxu0 0
        %1760 = vmatprep.mubr.bf16.mxu0 0
        %1761 = vmatmul.mubr.bf16.gmra.mxu0 %v1672
        %v1762 = vpop.f32.mrf.mxu0
        %v1763 = vadd.f32 0.0, %v1762
        %v1764 = vpop.f32.mrf.mxu0
        %v1765 = vpop.f32.mrf.mxu0
        %v1766 = vadd.f32 0.0, %v1765
        %v1767 = vpop.f32.mrf.mxu0
        %1768 = vmatprep.mubr.bf16.mxu0 0
        %1769 = vmatmul.mubr.bf16.gmra.mxu0 %v1673
        %v1770 = vpop.f32.mrf.mxu0
        %v1771 = vadd.f32 0.0, %v1770
        %v1772 = vpop.f32.mrf.mxu0
        %v1773 = vpop.f32.mrf.mxu0
        %v1774 = vadd.f32 0.0, %v1773
        %v1775 = vpop.f32.mrf.mxu0
        %1776 = vmatprep.mubr.bf16.mxu0 0
        %1777 = vmatmul.mubr.bf16.gmra.mxu0 %v1674
        %v1778 = vpop.f32.mrf.mxu0
        %v1779 = vadd.f32 0.0, %v1778
        %v1780 = vpop.f32.mrf.mxu0
        %v1781 = vpop.f32.mrf.mxu0
        %v1782 = vadd.f32 0.0, %v1781
        %v1783 = vpop.f32.mrf.mxu0
        %1784 = vmatprep.mubr.bf16.mxu0 0
        %1785 = vmatmul.mubr.bf16.gmra.mxu0 %v1675
        %v1786 = vpop.f32.mrf.mxu0
        %v1787 = vadd.f32 0.0, %v1786
        %v1788 = vpop.f32.mrf.mxu0
        %v1789 = vpop.f32.mrf.mxu0
        %v1790 = vadd.f32 0.0, %v1789
        %v1791 = vpop.f32.mrf.mxu0
        %1792 = vdwg.mxu0
        %v1793 = vadd.f32 %v1662, %v1763
        %v1794 = vadd.f32 %v1663, %v1766
        %v1795 = vadd.f32 %v1664, %v1771
        %v1796 = vadd.f32 %v1665, %v1774
        %v1797 = vadd.f32 %v1666, %v1779
        %v1798 = vadd.f32 %v1667, %v1782
        %v1799 = vadd.f32 %v1668, %v1787
        %v1800 = vadd.f32 %v1669, %v1790
        %v1802 = vshrl.u32 %v295, 16
        %v1804 = vrot.slane %v1802, 4
        %v1805 = vshll.u32 %v295, 16
        %v1807 = vrot.slane %v1805, 5
        %v1808 = vor.u32 %v1804, %v1807
        %v1809 = vrot.slane %v1808, 4
        %v1811 = vshll.u32 %v296, 16
        %v1813 = vrot.slane %v1811, 5
        %v1814 = vsel %vm750, %v1809, %v1813
        %v1815 = vunpack.c.l.b16 %v1814
        %v1816 = vpack.c.b16 %v865, %v864
        %v1817 = vpack.c.b16 %v867, %v866
        %v1818 = vpack.c.b16 %v869, %v868
        %v1819 = vpack.c.b16 %v1815, %v870
        %v1840 = vunpack.c.l.b16 %v458
        %v1841 = vunpack.c.l.b16 %v459
        %v1842 = vunpack.c.l.b16 %v460
        %v1843 = vunpack.c.l.b16 %v461
        %v1844 = vunpack.c.l.b16 %v462
        %v1845 = vunpack.c.l.b16 %v463
        %v1846 = vunpack.c.l.b16 %v464
        %v1847 = vunpack.c.l.b16 %v465
        %v1848 = vunpack.c.l.b16 %v466
        %v1849 = vunpack.c.l.b16 %v467
        %v1850 = vunpack.c.l.b16 %v468
        %v1851 = vunpack.c.l.b16 %v469
        %v1852 = vunpack.c.l.b16 %v470
        %v1853 = vunpack.c.l.b16 %v471
        %v1854 = vunpack.c.l.b16 %v472
        %v1855 = vunpack.c.l.b16 %v473
        %v1856 = vpack.c.b16 %v1841, %v1840
        %v1857 = vpack.c.b16 %v1843, %v1842
        %v1858 = vpack.c.b16 %v1845, %v1844
        %v1859 = vpack.c.b16 %v1847, %v1846
        %v1860 = vpack.c.b16 %v1849, %v1848
        %v1861 = vpack.c.b16 %v1851, %v1850
        %v1862 = vpack.c.b16 %v1853, %v1852
        %v1863 = vpack.c.b16 %v1855, %v1854
        %1872 = vmatprep.subr.bf16.mxu0 0
        %1873 = vmatpush1.bf16.msra.mxu0 %v1863
        %1874 = vmatprep.subr.bf16.mxu0 0
        %1875 = vmatpush1.bf16.msra.mxu0 %v1862
        %1876 = vmatprep.subr.bf16.mxu0 0
        %1877 = vmatpush1.bf16.msra.mxu0 %v1861
        %1878 = vmatprep.subr.bf16.mxu0 0
        %1879 = vmatpush1.bf16.msra.mxu0 %v1860
        %1880 = vmatprep.subr.bf16.mxu0 0
        %1881 = vmatpush1.bf16.msra.mxu0 %v1859
        %1882 = vmatprep.subr.bf16.mxu0 0
        %1883 = vmatpush1.bf16.msra.mxu0 %v1858
        %1884 = vmatprep.subr.bf16.mxu0 0
        %1885 = vmatpush1.bf16.msra.mxu0 %v1857
        %1886 = vmatprep.subr.bf16.mxu0 0
        %1887 = vmatpush1.bf16.msra.mxu0 %v1856
        %1888 = vmatprep.subr.bf16.mxu0 0
        %1889 = vmatpush2.bf16.msra.mxu0 0
        %1890 = vmatprep.subr.bf16.mxu0 0
        %1891 = vmatpush2.bf16.msra.mxu0 0
        %1892 = vmatprep.subr.bf16.mxu0 0
        %1893 = vmatpush2.bf16.msra.mxu0 0
        %1894 = vmatprep.subr.bf16.mxu0 0
        %1895 = vmatpush2.bf16.msra.mxu0 0
        %1896 = vmatprep.subr.bf16.mxu0 0
        %1897 = vmatpush2.bf16.msra.mxu0 0
        %1898 = vmatprep.subr.bf16.mxu0 0
        %1899 = vmatpush2.bf16.msra.mxu0 0
        %1900 = vmatprep.subr.bf16.mxu0 0
        %1901 = vmatpush2.bf16.msra.mxu0 0
        %1902 = vmatprep.subr.bf16.mxu0 0
        %1903 = vmatpush2.bf16.msra.mxu0 0
        %1904 = vmatprep.mubr.bf16.mxu0 0
        %1905 = vmatmul.mubr.bf16.gmra.mxu0 %v1816
        %v1906 = vpop.f32.mrf.mxu0
        %v1907 = vadd.f32 0.0, %v1906
        %v1908 = vpop.f32.mrf.mxu0
        %v1909 = vpop.f32.mrf.mxu0
        %v1910 = vadd.f32 0.0, %v1909
        %v1911 = vpop.f32.mrf.mxu0
        %1912 = vmatprep.mubr.bf16.mxu0 0
        %1913 = vmatmul.mubr.bf16.gmra.mxu0 %v1817
        %v1914 = vpop.f32.mrf.mxu0
        %v1915 = vadd.f32 0.0, %v1914
        %v1916 = vpop.f32.mrf.mxu0
        %v1917 = vpop.f32.mrf.mxu0
        %v1918 = vadd.f32 0.0, %v1917
        %v1919 = vpop.f32.mrf.mxu0
        %1920 = vmatprep.mubr.bf16.mxu0 0
        %1921 = vmatmul.mubr.bf16.gmra.mxu0 %v1818
        %v1922 = vpop.f32.mrf.mxu0
        %v1923 = vadd.f32 0.0, %v1922
        %v1924 = vpop.f32.mrf.mxu0
        %v1925 = vpop.f32.mrf.mxu0
        %v1926 = vadd.f32 0.0, %v1925
        %v1927 = vpop.f32.mrf.mxu0
        %1928 = vmatprep.mubr.bf16.mxu0 0
        %1929 = vmatmul.mubr.bf16.gmra.mxu0 %v1819
        %v1930 = vpop.f32.mrf.mxu0
        %v1931 = vadd.f32 0.0, %v1930
        %v1932 = vpop.f32.mrf.mxu0
        %v1933 = vpop.f32.mrf.mxu0
        %v1934 = vadd.f32 0.0, %v1933
        %v1935 = vpop.f32.mrf.mxu0
        %1936 = vdwg.mxu0
        %v1937 = vadd.f32 %v1793, %v1907
        %v1938 = vadd.f32 %v1794, %v1910
        %v1939 = vadd.f32 %v1795, %v1915
        %v1940 = vadd.f32 %v1796, %v1918
        %v1941 = vadd.f32 %v1797, %v1923
        %v1942 = vadd.f32 %v1798, %v1926
        %v1943 = vadd.f32 %v1799, %v1931
        %v1944 = vadd.f32 %v1800, %v1934
        %v1945 = vpack.c.bf16 %v1937, %v1937
        %v1946 = vpack.c.bf16 %v1938, %v1938
        %v1947 = vpack.c.bf16 %v1939, %v1939
        %v1948 = vpack.c.bf16 %v1940, %v1940
        %v1949 = vpack.c.bf16 %v1941, %v1941
        %v1950 = vpack.c.bf16 %v1942, %v1942
        %v1951 = vpack.c.bf16 %v1943, %v1943
        %v1952 = vpack.c.bf16 %v1944, %v1944
        %1953 = vst [vmem:[%s251] sm:$0xf] %v1945
        %1954 = vst [vmem:[%s251 + $0x4] sm:$0xf] %v1946
        %1955 = vst [vmem:[%s251 + $0x8] sm:$0xf] %v1947
        %1956 = vst [vmem:[%s251 + $0xc] sm:$0xf] %v1948
        %1957 = vst [vmem:[%s251 + $0x10] sm:$0xf] %v1949
        %1958 = vst [vmem:[%s251 + $0x14] sm:$0xf] %v1950
        %1959 = vst [vmem:[%s251 + $0x18] sm:$0xf] %v1951
        %1960 = vst [vmem:[%s251 + $0x1c] sm:$0xf] %v1952
        %v1961 = vadd.f32 %v1937, %v1938
        %v1962 = vadd.f32 %v1961, %v1939
        %v1963 = vadd.f32 %v1962, %v1940
        %v1964 = vadd.f32 %v1963, %v1941
        %v1965 = vadd.f32 %v1964, %v1942
        %v1966 = vadd.f32 %v1965, %v1943
        %v1967 = vadd.f32 %v1966, %v1944
        %v1968 = vrot.slane %v1967, 4
        %v1969 = vadd.f32 %v1967, %v1968
        %v1970 = vrot.slane %v1969, 2
        %v1971 = vadd.f32 %v1969, %v1970
        %v1972 = vrot.slane %v1971, 1
        %v1973 = vadd.f32 %v1971, %v1972
        %v1974 = vmul.f32 %v1937, %v1937
        %v1975 = vmul.f32 %v1938, %v1938
        %v1976 = vmul.f32 %v1939, %v1939
        %v1977 = vmul.f32 %v1940, %v1940
        %v1978 = vmul.f32 %v1941, %v1941
        %v1979 = vmul.f32 %v1942, %v1942
        %v1980 = vmul.f32 %v1943, %v1943
        %v1981 = vmul.f32 %v1944, %v1944
        %v1982 = vadd.f32 %v1974, %v1975
        %v1983 = vadd.f32 %v1982, %v1976
        %v1984 = vadd.f32 %v1983, %v1977
        %v1985 = vadd.f32 %v1984, %v1978
        %v1986 = vadd.f32 %v1985, %v1979
        %v1987 = vadd.f32 %v1986, %v1980
        %v1988 = vadd.f32 %v1987, %v1981
        %v1989 = vrot.slane %v1988, 4
        %v1990 = vadd.f32 %v1988, %v1989
        %v1991 = vrot.slane %v1990, 2
        %v1992 = vadd.f32 %v1990, %v1991
        %v1993 = vrot.slane %v1992, 1
        %v1994 = vadd.f32 %v1992, %v1993
        %vm1995 = vcmask 1040384
        %v1996 = vsel %vm1995, %v1973, %v1994
        %vm1997 = vcmask 1041408
        %v1998 = vsel %vm1997, %v1996, 0.0
        %1999 = vst [vmem:[%s258] sm:$0xff] %v1998
        %v2000 = vld [vmem:[%s2] sm:$0xf]
        %v2001 = vld [vmem:[%s2 + $0x4] sm:$0xf]
        %v2002 = vld [vmem:[%s2 + $0x8] sm:$0xf]
        %v2003 = vld [vmem:[%s2 + $0xc] sm:$0xf]
        %v2004 = vld [vmem:[%s2 + $0x10] sm:$0xf]
        %v2005 = vld [vmem:[%s2 + $0x14] sm:$0xf]
        %v2006 = vld [vmem:[%s2 + $0x18] sm:$0xf]
        %v2007 = vld [vmem:[%s2 + $0x1c] sm:$0xf]
        %v2008 = vld [vmem:[%s2 + $0x20] sm:$0xf]
        %v2009 = vld [vmem:[%s2 + $0x24] sm:$0xf]
        %v2010 = vld [vmem:[%s2 + $0x28] sm:$0xf]
        %v2011 = vld [vmem:[%s2 + $0x2c] sm:$0xf]
        %v2012 = vld [vmem:[%s2 + $0x30] sm:$0xf]
        %v2013 = vld [vmem:[%s2 + $0x34] sm:$0xf]
        %v2014 = vld [vmem:[%s2 + $0x38] sm:$0xf]
        %v2015 = vld [vmem:[%s2 + $0x3c] sm:$0xf]
        %v2032 = vunpack.c.l.b16 %v2000
        %v2033 = vunpack.c.l.b16 %v2001
        %v2034 = vunpack.c.l.b16 %v2002
        %v2035 = vunpack.c.l.b16 %v2003
        %v2036 = vunpack.c.l.b16 %v2004
        %v2037 = vunpack.c.l.b16 %v2005
        %v2038 = vunpack.c.l.b16 %v2006
        %v2039 = vunpack.c.l.b16 %v2007
        %v2040 = vunpack.c.l.b16 %v2008
        %v2041 = vunpack.c.l.b16 %v2009
        %v2042 = vunpack.c.l.b16 %v2010
        %v2043 = vunpack.c.l.b16 %v2011
        %v2044 = vunpack.c.l.b16 %v2012
        %v2045 = vunpack.c.l.b16 %v2013
        %v2046 = vunpack.c.l.b16 %v2014
        %v2047 = vunpack.c.l.b16 %v2015
        %v2048 = vpack.c.b16 %v2033, %v2032
        %v2049 = vpack.c.b16 %v2035, %v2034
        %v2050 = vpack.c.b16 %v2037, %v2036
        %v2051 = vpack.c.b16 %v2039, %v2038
        %v2052 = vpack.c.b16 %v2041, %v2040
        %v2053 = vpack.c.b16 %v2043, %v2042
        %v2054 = vpack.c.b16 %v2045, %v2044
        %v2055 = vpack.c.b16 %v2047, %v2046
        %2064 = vmatprep.subr.bf16.mxu0 0
        %2065 = vmatpush1.bf16.msra.mxu0 %v2055
        %2066 = vmatprep.subr.bf16.mxu0 0
        %2067 = vmatpush1.bf16.msra.mxu0 %v2054
        %2068 = vmatprep.subr.bf16.mxu0 0
        %2069 = vmatpush1.bf16.msra.mxu0 %v2053
        %2070 = vmatprep.subr.bf16.mxu0 0
        %2071 = vmatpush1.bf16.msra.mxu0 %v2052
        %2072 = vmatprep.subr.bf16.mxu0 0
        %2073 = vmatpush1.bf16.msra.mxu0 %v2051
        %2074 = vmatprep.subr.bf16.mxu0 0
        %2075 = vmatpush1.bf16.msra.mxu0 %v2050
        %2076 = vmatprep.subr.bf16.mxu0 0
        %2077 = vmatpush1.bf16.msra.mxu0 %v2049
        %2078 = vmatprep.subr.bf16.mxu0 0
        %2079 = vmatpush1.bf16.msra.mxu0 %v2048
        %2080 = vmatprep.subr.bf16.mxu0 0
        %2081 = vmatpush2.bf16.msra.mxu0 0
        %2082 = vmatprep.subr.bf16.mxu0 0
        %2083 = vmatpush2.bf16.msra.mxu0 0
        %2084 = vmatprep.subr.bf16.mxu0 0
        %2085 = vmatpush2.bf16.msra.mxu0 0
        %2086 = vmatprep.subr.bf16.mxu0 0
        %2087 = vmatpush2.bf16.msra.mxu0 0
        %2088 = vmatprep.subr.bf16.mxu0 0
        %2089 = vmatpush2.bf16.msra.mxu0 0
        %2090 = vmatprep.subr.bf16.mxu0 0
        %2091 = vmatpush2.bf16.msra.mxu0 0
        %2092 = vmatprep.subr.bf16.mxu0 0
        %2093 = vmatpush2.bf16.msra.mxu0 0
        %2094 = vmatprep.subr.bf16.mxu0 0
        %2095 = vmatpush2.bf16.msra.mxu0 0
        %2096 = vmatprep.mubr.bf16.mxu0 0
        %2097 = vmatmul.mubr.bf16.gmra.mxu0 %v1161
        %v2098 = vpop.f32.mrf.mxu0
        %v2099 = vadd.f32 0.0, %v2098
        %v2100 = vpop.f32.mrf.mxu0
        %v2101 = vpop.f32.mrf.mxu0
        %v2102 = vadd.f32 0.0, %v2101
        %v2103 = vpop.f32.mrf.mxu0
        %2104 = vmatprep.mubr.bf16.mxu0 0
        %2105 = vmatmul.mubr.bf16.gmra.mxu0 %v1162
        %v2106 = vpop.f32.mrf.mxu0
        %v2107 = vadd.f32 0.0, %v2106
        %v2108 = vpop.f32.mrf.mxu0
        %v2109 = vpop.f32.mrf.mxu0
        %v2110 = vadd.f32 0.0, %v2109
        %v2111 = vpop.f32.mrf.mxu0
        %2112 = vmatprep.mubr.bf16.mxu0 0
        %2113 = vmatmul.mubr.bf16.gmra.mxu0 %v1163
        %v2114 = vpop.f32.mrf.mxu0
        %v2115 = vadd.f32 0.0, %v2114
        %v2116 = vpop.f32.mrf.mxu0
        %v2117 = vpop.f32.mrf.mxu0
        %v2118 = vadd.f32 0.0, %v2117
        %v2119 = vpop.f32.mrf.mxu0
        %2120 = vmatprep.mubr.bf16.mxu0 0
        %2121 = vmatmul.mubr.bf16.gmra.mxu0 %v1164
        %v2122 = vpop.f32.mrf.mxu0
        %v2123 = vadd.f32 0.0, %v2122
        %v2124 = vpop.f32.mrf.mxu0
        %v2125 = vpop.f32.mrf.mxu0
        %v2126 = vadd.f32 0.0, %v2125
        %v2127 = vpop.f32.mrf.mxu0
        %2128 = vdwg.mxu0
        %v2129 = vpack.c.bf16 %v2099, %v2099
        %v2130 = vpack.c.bf16 %v2102, %v2102
        %v2131 = vpack.c.bf16 %v2107, %v2107
        %v2132 = vpack.c.bf16 %v2110, %v2110
        %v2133 = vpack.c.bf16 %v2115, %v2115
        %v2134 = vpack.c.bf16 %v2118, %v2118
        %v2135 = vpack.c.bf16 %v2123, %v2123
        %v2136 = vpack.c.bf16 %v2126, %v2126
        %2137 = vst [vmem:[%s265] sm:$0xf] %v2129
        %2138 = vst [vmem:[%s265 + $0x4] sm:$0xf] %v2130
        %2139 = vst [vmem:[%s265 + $0x8] sm:$0xf] %v2131
        %2140 = vst [vmem:[%s265 + $0xc] sm:$0xf] %v2132
        %2141 = vst [vmem:[%s265 + $0x10] sm:$0xf] %v2133
        %2142 = vst [vmem:[%s265 + $0x14] sm:$0xf] %v2134
        %2143 = vst [vmem:[%s265 + $0x18] sm:$0xf] %v2135
        %2144 = vst [vmem:[%s265 + $0x1c] sm:$0xf] %v2136
        %v2145 = vadd.f32 %v2099, %v2102
        %v2146 = vadd.f32 %v2145, %v2107
        %v2147 = vadd.f32 %v2146, %v2110
        %v2148 = vadd.f32 %v2147, %v2115
        %v2149 = vadd.f32 %v2148, %v2118
        %v2150 = vadd.f32 %v2149, %v2123
        %v2151 = vadd.f32 %v2150, %v2126
        %v2152 = vrot.slane %v2151, 4
        %v2153 = vadd.f32 %v2151, %v2152
        %v2154 = vrot.slane %v2153, 2
        %v2155 = vadd.f32 %v2153, %v2154
        %v2156 = vrot.slane %v2155, 1
        %v2157 = vadd.f32 %v2155, %v2156
        %v2158 = vmul.f32 %v2099, %v2099
        %v2159 = vmul.f32 %v2102, %v2102
        %v2160 = vmul.f32 %v2107, %v2107
        %v2161 = vmul.f32 %v2110, %v2110
        %v2162 = vmul.f32 %v2115, %v2115
        %v2163 = vmul.f32 %v2118, %v2118
        %v2164 = vmul.f32 %v2123, %v2123
        %v2165 = vmul.f32 %v2126, %v2126
        %v2166 = vadd.f32 %v2158, %v2159
        %v2167 = vadd.f32 %v2166, %v2160
        %v2168 = vadd.f32 %v2167, %v2161
        %v2169 = vadd.f32 %v2168, %v2162
        %v2170 = vadd.f32 %v2169, %v2163
        %v2171 = vadd.f32 %v2170, %v2164
        %v2172 = vadd.f32 %v2171, %v2165
        %v2173 = vrot.slane %v2172, 4
        %v2174 = vadd.f32 %v2172, %v2173
        %v2175 = vrot.slane %v2174, 2
        %v2176 = vadd.f32 %v2174, %v2175
        %v2177 = vrot.slane %v2176, 1
        %v2178 = vadd.f32 %v2176, %v2177
        %v2179 = vsel %vm1995, %v2157, %v2178
        %v2180 = vsel %vm1997, %v2179, 0.0
        %2181 = vst [vmem:[%s272] sm:$0xff] %v2180
        %s2182 = sand.u32 %s103, 1
        %s2183 = scalar_lea.sflag [#allocation3], %s2182
        %s2184 = sand.u32 %s103, 1
        %s2185 = smul.addr %s2184, 32
        %s2186 = scalar_lea.vmem [#allocation2], %s2185
        %s2187 = sand.u32 %s27, 1
        %s2188 = scalar_lea.sflag [#allocation5], %s2187
        %s2189 = sand.u32 %s129, 1
        %s2190 = smul.addr %s2189, 8
        %s2191 = scalar_lea.vmem [#allocation4], %s2190
        %s2192 = sand.u32 %s27, 1
        %s2193 = scalar_lea.sflag [#allocation5], %s2192
        %s2194 = sand.u32 %s155, 1
        %s2195 = smul.addr %s2194, 32
        %s2196 = scalar_lea.vmem [#allocation6], %s2195
        %s2197 = sand.u32 %s181, 1
        %s2198 = scalar_lea.sflag [#allocation8], %s2197
        %s2199 = sand.u32 %s181, 1
        %s2200 = smul.addr %s2199, 8
        %s2201 = scalar_lea.vmem [#allocation7], %s2200
        // Predicated region
        $region33: #{tpu_custom_call.1} parent=31 // pred_check
          %p2202 = pneg %p113
        $region34: #{tpu_custom_call.1} parent=31 // pred_check_branch
          %2204 = sbr.rel (%p2202) target = $region36
        $region35: #{tpu_custom_call.1} parent=31 // pred_region
          %s2206 = ssub.s32 512, 512
          %2207 = vsyncadd %s2183, %s2206
          %s2208 = smul.addr %s27, 8
          %s2209 = smul.addr %s2208, 64
          %s2210 = scalar_lea.hbm %s3, %s2209
          %s2211 = sshll.u32 %s2186, 4
          %s2212 = int_to_ptr.vmem [resolvable:$true] %s2211
          %2217 = dma.vmem_to_hbm [thread:$0]  %s2212, 512, %s2210, %s2183, 64, 64, 4
        $region36: #{tpu_custom_call.1} parent=31 // pred_fallthru
          _
        // Predicated region
        $region37: #{tpu_custom_call.1} parent=31 // pred_check
          %p2218 = pneg %p139
        $region38: #{tpu_custom_call.1} parent=31 // pred_check_branch
          %2220 = sbr.rel (%p2218) target = $region40
        $region39: #{tpu_custom_call.1} parent=31 // pred_region
          %s2222 = ssub.s32 128, 128
          %2223 = vsyncadd %s2188, %s2222
          %s2224 = smul.addr %s27, 128
          %s2225 = scalar_lea.hbm %s4, %s2224
          %s2227 = sshll.u32 %s2191, 4
          %s2228 = int_to_ptr.vmem [resolvable:$true] %s2227
          %2230 = dma.vmem_to_hbm [thread:$0]  %s2228, 128, %s2225, %s2188
        $region40: #{tpu_custom_call.1} parent=31 // pred_fallthru
          _
        // Predicated region
        $region41: #{tpu_custom_call.1} parent=31 // pred_check
          %p2231 = pneg %p165
        $region42: #{tpu_custom_call.1} parent=31 // pred_check_branch
          %2233 = sbr.rel (%p2231) target = $region44
        $region43: #{tpu_custom_call.1} parent=31 // pred_region
          %s2235 = ssub.s32 512, 512
          %2236 = vsyncadd %s2193, %s2235
          %s2237 = smul.addr %s27, 8
          %s2238 = smul.addr %s2237, 64
          %s2239 = scalar_lea.hbm %s5, %s2238
          %s2240 = sshll.u32 %s2196, 4
          %s2241 = int_to_ptr.vmem [resolvable:$true] %s2240
          %2246 = dma.vmem_to_hbm [thread:$0]  %s2241, 512, %s2239, %s2193, 64, 64, 4
        $region44: #{tpu_custom_call.1} parent=31 // pred_fallthru
          _
        // Predicated region
        $region45: #{tpu_custom_call.1} parent=31 // pred_check
          %p2247 = pneg %p191
        $region46: #{tpu_custom_call.1} parent=31 // pred_check_branch
          %2249 = sbr.rel (%p2247) target = $region48
        $region47: #{tpu_custom_call.1} parent=31 // pred_region
          %s2251 = ssub.s32 128, 128
          %2252 = vsyncadd %s2198, %s2251
          %s2253 = smul.addr %s27, 128
          %s2254 = scalar_lea.hbm %s6, %s2253
          %s2256 = sshll.u32 %s2201, 4
          %s2257 = int_to_ptr.vmem [resolvable:$true] %s2256
          %2259 = dma.vmem_to_hbm [thread:$0]  %s2257, 128, %s2254, %s2198
        $region48: #{tpu_custom_call.1} parent=31 // pred_fallthru
          _
      $region32: #{tpu_custom_call.1} parent=5 // pred_fallthru
        _
      %p2260 = scmp.le.s32.totalorder 2, %s22
      // Predicated region
      $region49: #{tpu_custom_call.1} parent=5 // pred_check
        %p2261 = pneg %p2260
      $region50: #{tpu_custom_call.1} parent=5 // pred_check_branch
        %2263 = sbr.rel (%p2261) target = $region52
      $region51: #{tpu_custom_call.1} parent=5 // pred_region
        %s2264 = ssub.s32 %s22, 2
        // Predicated region
        $region53: #{tpu_custom_call.1} parent=51 // pred_check
          %p2265 = pneg %p119
        $region54: #{tpu_custom_call.1} parent=51 // pred_check_branch
          %2267 = sbr.rel (%p2265) target = $region56
        $region55: #{tpu_custom_call.1} parent=51 // pred_region
          %s2268 = sand.u32 %s104, 1
          %s2269 = scalar_lea.sflag [#allocation3], %s2268
          %s2270 = sand.u32 %s104, 1
          %s2271 = smul.addr %s2270, 32
          %s2272 = scalar_lea.vmem [#allocation2], %s2271
          %2273 = dma.done %s2269, 512
        $region56: #{tpu_custom_call.1} parent=51 // pred_fallthru
          _
        // Predicated region
        $region57: #{tpu_custom_call.1} parent=51 // pred_check
          %p2274 = pneg %p145
        $region58: #{tpu_custom_call.1} parent=51 // pred_check_branch
          %2276 = sbr.rel (%p2274) target = $region60
        $region59: #{tpu_custom_call.1} parent=51 // pred_region
          %s2277 = sand.u32 %s28, 1
          %s2278 = scalar_lea.sflag [#allocation5], %s2277
          %s2279 = sand.u32 %s130, 1
          %s2280 = smul.addr %s2279, 8
          %s2281 = scalar_lea.vmem [#allocation4], %s2280
          %2282 = dma.done %s2278, 128
        $region60: #{tpu_custom_call.1} parent=51 // pred_fallthru
          _
        // Predicated region
        $region61: #{tpu_custom_call.1} parent=51 // pred_check
          %p2283 = pneg %p171
        $region62: #{tpu_custom_call.1} parent=51 // pred_check_branch
          %2285 = sbr.rel (%p2283) target = $region64
        $region63: #{tpu_custom_call.1} parent=51 // pred_region
          %s2286 = sand.u32 %s28, 1
          %s2287 = scalar_lea.sflag [#allocation5], %s2286
          %s2288 = sand.u32 %s156, 1
          %s2289 = smul.addr %s2288, 32
          %s2290 = scalar_lea.vmem [#allocation6], %s2289
          %2291 = dma.done %s2287, 512
        $region64: #{tpu_custom_call.1} parent=51 // pred_fallthru
          _
        // Predicated region
        $region65: #{tpu_custom_call.1} parent=51 // pred_check
          %p2292 = pneg %p197
        $region66: #{tpu_custom_call.1} parent=51 // pred_check_branch
          %2294 = sbr.rel (%p2292) target = $region68
        $region67: #{tpu_custom_call.1} parent=51 // pred_region
          %s2295 = sand.u32 %s182, 1
          %s2296 = scalar_lea.sflag [#allocation8], %s2295
          %s2297 = sand.u32 %s182, 1
          %s2298 = smul.addr %s2297, 8
          %s2299 = scalar_lea.vmem [#allocation7], %s2298
          %2300 = dma.done %s2296, 128
        $region68: #{tpu_custom_call.1} parent=51 // pred_fallthru
          _
      $region52: #{tpu_custom_call.1} parent=5 // pred_fallthru
        _
    $region6: #{tpu_custom_call.1} parent=1 // loop_footer
      %s26 = sadd.s32 1, %s22
    $region7: #{tpu_custom_call.1} parent=1 // loop_footer_branch
      %21 = sbr.rel target = $region3
    $region8: #{tpu_custom_call.1} parent=1 // loop_exit
      _
    %2301 = vsyncpa [#allocation3], 1
    %s2302 = scalar_lea.sflag [#allocation3], 1
    %2303 = vsyncpa %s2302, 1
    %2304 = vsyncpa [#allocation5], 1
    %s2305 = scalar_lea.sflag [#allocation5], 1
    %2306 = vsyncpa %s2305, 1
    %2307 = vsyncpa [#allocation8], 1
    %s2308 = scalar_lea.sflag [#allocation8], 1
    %2309 = vsyncpa %s2308, 1

</llo_original>
